<compile_context>
chip_gen: v5e
topology: v5e:2x2
jax: 0.10.0
libtpu: 0.0.40
codegen_flags: <defaults>
</compile_context>

<pallas_src>
import functools

import jax
import jax.numpy as jnp
from jax.experimental import pallas as pl
from jax.experimental.pallas import tpu as pltpu

MATMUL_DTYPE = jnp.bfloat16  # MXU-native on v6e/v7x; f32 accumulation everywhere


# ----------------------------- Pallas kernels -----------------------------

def _conv3x3_relu_kernel(xp_ref, w_ref, b_ref, o_ref, *, h, w, pool):
    # xp_ref: (1, H+2, W+2, Cin) f32   padded image (no im2col in HBM)
    # w_ref:  (9*Cin, Ct)        bf16  taps stacked kh-major, kw, cin
    # b_ref:  (1, Ct)            f32
    # o_ref:  (1, HWo, Ct)       f32   HWo = H*W, or (H/2)*(W/2) if pool fused
    cin = xp_ref.shape[-1]
    ct = o_ref.shape[-1]
    # Build the 9 im2col taps from static slices of the VMEM block and fuse
    # them into a single K = 9*Cin matmul (much better MXU occupancy than
    # nine K=Cin dots).
    taps = jnp.concatenate(
        [xp_ref[0, kh:kh + h, kw:kw + w, :].reshape(h * w, cin)
         for kh in range(3) for kw in range(3)],
        axis=-1).astype(w_ref.dtype)                      # (H*W, 9*Cin) bf16
    acc = jnp.dot(taps, w_ref[...], preferred_element_type=jnp.float32)
    y = jnp.maximum(acc + b_ref[...], 0.0)                # f32 epilogue
    if pool:  # fused 2x2/stride-2 maxpool epilogue (saves an HBM round-trip)
        h2, w2 = h // 2, w // 2
        y = y.reshape(h2, 2, w2, 2, ct)
        y = jnp.maximum(y[:, 0], y[:, 1])                 # pool along H
        y = jnp.max(y, axis=2)                            # pool along W
        y = y.reshape(h2 * w2, ct)
    o_ref[0] = y.astype(o_ref.dtype)


def conv3x3_relu(x, wf, bf, *, pool=False, cout_tile=256):
    """x: (N,H,W,Cin) f32; wf: (9*Cin,Cout) bf16; bf: (1,Cout) f32."""
    n, h, wd, cin = x.shape
    cout = wf.shape[-1]
    assert wf.shape[0] == 9 * cin
    if pool:
        assert h % 2 == 0 and wd % 2 == 0
    xp = jnp.pad(x, ((0, 0), (1, 1), (1, 1), (0, 0)))
    tc = cout_tile if cout % cout_tile == 0 else cout
    ho, wo = (h // 2, wd // 2) if pool else (h, wd)
    out = pl.pallas_call(
        functools.partial(_conv3x3_relu_kernel, h=h, w=wd, pool=pool),
        out_shape=jax.ShapeDtypeStruct((n, ho * wo, cout), jnp.float32),
        grid=(n, cout // tc),
        in_specs=[
            pl.BlockSpec((1, h + 2, wd + 2, cin), lambda i, j: (i, 0, 0, 0)),
            pl.BlockSpec((9 * cin, tc), lambda i, j: (0, j)),
            pl.BlockSpec((1, tc), lambda i, j: (0, j)),
        ],
        out_specs=pl.BlockSpec((1, ho * wo, tc), lambda i, j: (i, 0, j)),
        compiler_params=pltpu.CompilerParams(
            dimension_semantics=("parallel", "parallel")),
    )(xp, wf, bf)
    return out.reshape(n, ho, wo, cout)


def _maxpool2x2_kernel(x_ref, o_ref):
    # x_ref: (1, H, W, C) f32 ; o_ref: (1, H//2, W//2, C) f32
    _, h, w, c = x_ref.shape
    y = x_ref[0].reshape(h // 2, 2, w // 2, 2, c)
    y = jnp.maximum(y[:, 0], y[:, 1])    # pool along H (whole-block max)
    y = jnp.max(y, axis=2)               # pool along W (whole-block max)
    o_ref[0] = y.astype(o_ref.dtype)


def maxpool2x2(x):
    """x: (N,H,W,C) -> (N,H//2,W//2,C), kernel 2, stride 2 (vectorized)."""
    n, h, w, c = x.shape
    assert h % 2 == 0 and w % 2 == 0
    return pl.pallas_call(
        _maxpool2x2_kernel,
        out_shape=jax.ShapeDtypeStruct((n, h // 2, w // 2, c), jnp.float32),
        grid=(n,),
        in_specs=[pl.BlockSpec((1, h, w, c), lambda i: (i, 0, 0, 0))],
        out_specs=pl.BlockSpec((1, h // 2, w // 2, c), lambda i: (i, 0, 0, 0)),
        compiler_params=pltpu.CompilerParams(
            dimension_semantics=("parallel",)),
    )(x)


def _linear_kernel(x_ref, w_ref, b_ref, o_ref, acc_ref, *, relu):
    kk = pl.program_id(1)

    @pl.when(kk == 0)
    def _():
        acc_ref[...] = jnp.zeros_like(acc_ref)

    acc_ref[...] += jnp.dot(x_ref[...].astype(w_ref.dtype), w_ref[...],
                            preferred_element_type=jnp.float32)

    @pl.when(kk == pl.num_programs(1) - 1)
    def _():
        y = acc_ref[...] + b_ref[...]
        if relu:
            y = jnp.maximum(y, 0.0)
        o_ref[...] = y.astype(o_ref.dtype)


def linear(x, w, b, *, relu=False, tile_n=512, tile_k=512):
    """x: (N,K) f32; w: (K,M) bf16; b: (1,M) f32.  K-tiled streaming matmul."""
    n, k = x.shape
    m = w.shape[1]
    tn = tile_n if m % tile_n == 0 else m
    tk = tile_k if k % tile_k == 0 else k
    return pl.pallas_call(
        functools.partial(_linear_kernel, relu=relu),
        out_shape=jax.ShapeDtypeStruct((n, m), jnp.float32),
        grid=(m // tn, k // tk),
        in_specs=[
            pl.BlockSpec((n, tk), lambda j, kk: (0, kk)),
            pl.BlockSpec((tk, tn), lambda j, kk: (kk, j)),
            pl.BlockSpec((1, tn), lambda j, kk: (0, j)),
        ],
        out_specs=pl.BlockSpec((n, tn), lambda j, kk: (0, j)),
        scratch_shapes=[pltpu.VMEM((n, tn), jnp.float32)],
        compiler_params=pltpu.CompilerParams(
            dimension_semantics=("parallel", "arbitrary")),
    )(x, w, b)


# ------------------------- parameters / forward ---------------------------

def xavier_uniform(key, shape, fan_in, fan_out):
    bound = float(jnp.sqrt(6.0 / (fan_in + fan_out)))
    return jax.random.uniform(key, shape, jnp.float32, -bound, bound)


def init_vgg_params(key, cfg, in_ch, flat_dim, hidden, num_classes):
    """PyTorch-convention params: conv w (3,3,Cin,Cout); fc w rows in NCHW-flat order."""
    params = {"features": [], "classifier": []}
    c = in_ch
    for v in cfg:
        if v == "M":
            continue
        key, kw, kb = jax.random.split(key, 3)
        w = xavier_uniform(kw, (3, 3, c, v), fan_in=c * 9, fan_out=v * 9)
        b = jax.random.uniform(kb, (v,), jnp.float32, -0.1, 0.1)
        params["features"].append((w, b))
        c = v
    for din, dout in [(flat_dim, hidden), (hidden, hidden),
                      (hidden, num_classes)]:
        key, kw, kb = jax.random.split(key, 3)
        w = xavier_uniform(kw, (din, dout), fan_in=din, fan_out=dout)
        b = jax.random.uniform(kb, (dout,), jnp.float32, -0.1, 0.1)
        params["classifier"].append((w, b))
    return params


def prepare_params(params, cfg, in_ch, in_hw):
    """One-time prep: reshape conv taps, pre-cast matmul weights to bf16, and
    fold the NCHW flatten order of fc1 into its rows so the kernels can
    consume the NHWC-flattened activation directly."""
    h = w = in_hw
    c = in_ch
    feats = []
    for v in cfg:
        if v == "M":
            h //= 2
            w //= 2
        else:
            wt, bt = params["features"][len(feats)]
            feats.append((wt.reshape(9 * c, v).astype(MATMUL_DTYPE),
                          bt.reshape(1, v).astype(jnp.float32)))
            c = v
    (w1, b1), (w2, b2), (w3, b3) = params["classifier"]
    w1p = w1.reshape(c, h, w, -1).transpose(1, 2, 0, 3).reshape(c * h * w, -1)
    cls = [(wt.astype(MATMUL_DTYPE), bt.reshape(1, -1).astype(jnp.float32))
           for wt, bt in [(w1p, b1), (w2, b2), (w3, b3)]]
    return {"features": feats, "classifier": cls}


def vgg_forward(prep, x_nchw, cfg, fuse_pool=True):
    # NCHW (PyTorch) -> NHWC for the kernels
    x = jnp.transpose(x_nchw, (0, 2, 3, 1)).astype(jnp.float32)
    ci = 0
    i = 0
    while i < len(cfg):
        v = cfg[i]
        if v == "M":
            x = maxpool2x2(x)
            i += 1
        else:
            wf, bf = prep["features"][ci]
            ci += 1
            fuse = fuse_pool and (i + 1 < len(cfg)) and cfg[i + 1] == "M"
            x = conv3x3_relu(x, wf, bf, pool=fuse)
            i += 2 if fuse else 1
    # NHWC flatten; the NCHW (torch.flatten) order is folded into fc1's rows.
    x = x.reshape(x.shape[0], -1)
    (w1, b1), (w2, b2), (w3, b3) = prep["classifier"]
    x = linear(x, w1, b1, relu=True)
    # TODO(synk): nn.Dropout(p=0.5) is identity in eval mode; training-mode
    # stochastic masking is not implemented.
    x = linear(x, w2, b2, relu=True)
    x = linear(x, w3, b3, relu=False)
    return x


def vgg_reference(params, x_nchw, cfg):
    """Pure-JAX reference (PyTorch semantics; bf16 matmul operands, f32 acc)."""
    dt = MATMUL_DTYPE
    x = jnp.transpose(x_nchw, (0, 2, 3, 1)).astype(jnp.float32)
    ci = 0
    for v in cfg:
        if v == "M":
            x = jax.lax.reduce_window(x, -jnp.inf, jax.lax.max,
                                      (1, 2, 2, 1), (1, 2, 2, 1), "VALID")
        else:
            w, b = params["features"][ci]
            ci += 1
            x = jax.lax.conv_general_dilated(
                x.astype(dt), w.astype(dt), (1, 1), "SAME",
                dimension_numbers=("NHWC", "HWIO", "NHWC"),
                preferred_element_type=jnp.float32)
            x = jnp.maximum(x + b, 0.0)
    # torch.flatten(x, start_dim=1) on NCHW
    x = jnp.transpose(x, (0, 3, 1, 2)).reshape(x.shape[0], -1)

    def lin(a, w, b):
        return jnp.dot(a.astype(dt), w.astype(dt),
                       preferred_element_type=jnp.float32) + b

    (w1, b1), (w2, b2), (w3, b3) = params["classifier"]
    x = jnp.maximum(lin(x, w1, b1), 0.0)
    x = jnp.maximum(lin(x, w2, b2), 0.0)
    return lin(x, w3, b3)


if __name__ == "__main__":
    # Mini VGG "features" config: ints = conv3x3+ReLU out-channels, 'M' = maxpool2x2
    cfg = [16, "M", 32, "M"]
    N, C, H, W = 2, 3, 16, 16           # small shapes (real VGG: 3x224x224)
    hidden, num_classes = 64, 10        # small classifier (real VGG: 4096 / 1000)
    flat_dim = 32 * (H // 4) * (W // 4)

    key = jax.random.PRNGKey(0)
    key, kx = jax.random.split(key)
    x = jax.random.normal(kx, (N, C, H, W), jnp.float32)   # PyTorch NCHW input
    params = init_vgg_params(key, cfg, C, flat_dim, hidden, num_classes)
    prep = prepare_params(params, cfg, C, H)

    out_fused = jax.block_until_ready(vgg_forward(prep, x, cfg, fuse_pool=True))
    out_plain = jax.block_until_ready(vgg_forward(prep, x, cfg, fuse_pool=False))
    ref = vgg_reference(params, x, cfg)

    assert out_fused.shape == (N, num_classes)
    assert jnp.allclose(out_fused, ref, rtol=1e-2, atol=1e-2), \
        float(jnp.max(jnp.abs(out_fused - ref)))
    assert jnp.allclose(out_plain, ref, rtol=1e-2, atol=1e-2), \
        float(jnp.max(jnp.abs(out_plain - ref)))
    print("KERNEL_OK")
</pallas_src>

<mosaic_0001>
module attributes {stable_mosaic.version = 11 : i64} {
  func.func @_conv3x3_relu_kernel(%arg0: i32, %arg1: i32, %arg2: memref<1x18x18x3xf32, #tpu.memory_space<vmem>>, %arg3: memref<27x16xbf16, #tpu.memory_space<vmem>>, %arg4: memref<1x16xf32, #tpu.memory_space<vmem>>, %arg5: memref<1x64x16xf32, #tpu.memory_space<vmem>>) attributes {dimension_semantics = [#tpu.dimension_semantics<parallel>, #tpu.dimension_semantics<parallel>], iteration_bounds = array<i64: 2, 1>, scalar_prefetch = 0 : i64, scratch_operands = 0 : i64, tpu.core_type = #tpu.core_type<tc>, window_params = [{transform_indices = @transform_0, window_bounds = array<i64: 1, 18, 18, 3>}, {transform_indices = @transform_1, window_bounds = array<i64: 27, 16>}, {transform_indices = @transform_2, window_bounds = array<i64: 1, 16>}, {transform_indices = @transform_3, window_bounds = array<i64: 1, 64, 16>}]} {
    %c0 = arith.constant 0 : index
    %c0_0 = arith.constant 0 : index
    %c0_1 = arith.constant 0 : index
    %c0_2 = arith.constant 0 : index
    %0 = vector.load %arg2[%c0, %c0_0, %c0_1, %c0_2] : memref<1x18x18x3xf32, #tpu.memory_space<vmem>>, vector<1x16x16x3xf32>
    %1 = vector.shape_cast %0 : vector<1x16x16x3xf32> to vector<16x16x3xf32>
    %2 = vector.shape_cast %1 : vector<16x16x3xf32> to vector<256x3xf32>
    %c0_3 = arith.constant 0 : index
    %c0_4 = arith.constant 0 : index
    %c1 = arith.constant 1 : index
    %c0_5 = arith.constant 0 : index
    %3 = vector.load %arg2[%c0_3, %c0_4, %c1, %c0_5] : memref<1x18x18x3xf32, #tpu.memory_space<vmem>>, vector<1x16x16x3xf32>
    %4 = vector.shape_cast %3 : vector<1x16x16x3xf32> to vector<16x16x3xf32>
    %5 = vector.shape_cast %4 : vector<16x16x3xf32> to vector<256x3xf32>
    %c0_6 = arith.constant 0 : index
    %c0_7 = arith.constant 0 : index
    %c2 = arith.constant 2 : index
    %c0_8 = arith.constant 0 : index
    %6 = vector.load %arg2[%c0_6, %c0_7, %c2, %c0_8] : memref<1x18x18x3xf32, #tpu.memory_space<vmem>>, vector<1x16x16x3xf32>
    %7 = vector.shape_cast %6 : vector<1x16x16x3xf32> to vector<16x16x3xf32>
    %8 = vector.shape_cast %7 : vector<16x16x3xf32> to vector<256x3xf32>
    %c0_9 = arith.constant 0 : index
    %c1_10 = arith.constant 1 : index
    %c0_11 = arith.constant 0 : index
    %c0_12 = arith.constant 0 : index
    %9 = vector.load %arg2[%c0_9, %c1_10, %c0_11, %c0_12] : memref<1x18x18x3xf32, #tpu.memory_space<vmem>>, vector<1x16x16x3xf32>
    %10 = vector.shape_cast %9 : vector<1x16x16x3xf32> to vector<16x16x3xf32>
    %11 = vector.shape_cast %10 : vector<16x16x3xf32> to vector<256x3xf32>
    %c0_13 = arith.constant 0 : index
    %c1_14 = arith.constant 1 : index
    %c1_15 = arith.constant 1 : index
    %c0_16 = arith.constant 0 : index
    %12 = vector.load %arg2[%c0_13, %c1_14, %c1_15, %c0_16] : memref<1x18x18x3xf32, #tpu.memory_space<vmem>>, vector<1x16x16x3xf32>
    %13 = vector.shape_cast %12 : vector<1x16x16x3xf32> to vector<16x16x3xf32>
    %14 = vector.shape_cast %13 : vector<16x16x3xf32> to vector<256x3xf32>
    %c0_17 = arith.constant 0 : index
    %c1_18 = arith.constant 1 : index
    %c2_19 = arith.constant 2 : index
    %c0_20 = arith.constant 0 : index
    %15 = vector.load %arg2[%c0_17, %c1_18, %c2_19, %c0_20] : memref<1x18x18x3xf32, #tpu.memory_space<vmem>>, vector<1x16x16x3xf32>
    %16 = vector.shape_cast %15 : vector<1x16x16x3xf32> to vector<16x16x3xf32>
    %17 = vector.shape_cast %16 : vector<16x16x3xf32> to vector<256x3xf32>
    %c0_21 = arith.constant 0 : index
    %c2_22 = arith.constant 2 : index
    %c0_23 = arith.constant 0 : index
    %c0_24 = arith.constant 0 : index
    %18 = vector.load %arg2[%c0_21, %c2_22, %c0_23, %c0_24] : memref<1x18x18x3xf32, #tpu.memory_space<vmem>>, vector<1x16x16x3xf32>
    %19 = vector.shape_cast %18 : vector<1x16x16x3xf32> to vector<16x16x3xf32>
    %20 = vector.shape_cast %19 : vector<16x16x3xf32> to vector<256x3xf32>
    %c0_25 = arith.constant 0 : index
    %c2_26 = arith.constant 2 : index
    %c1_27 = arith.constant 1 : index
    %c0_28 = arith.constant 0 : index
    %21 = vector.load %arg2[%c0_25, %c2_26, %c1_27, %c0_28] : memref<1x18x18x3xf32, #tpu.memory_space<vmem>>, vector<1x16x16x3xf32>
    %22 = vector.shape_cast %21 : vector<1x16x16x3xf32> to vector<16x16x3xf32>
    %23 = vector.shape_cast %22 : vector<16x16x3xf32> to vector<256x3xf32>
    %c0_29 = arith.constant 0 : index
    %c2_30 = arith.constant 2 : index
    %c2_31 = arith.constant 2 : index
    %c0_32 = arith.constant 0 : index
    %24 = vector.load %arg2[%c0_29, %c2_30, %c2_31, %c0_32] : memref<1x18x18x3xf32, #tpu.memory_space<vmem>>, vector<1x16x16x3xf32>
    %25 = vector.shape_cast %24 : vector<1x16x16x3xf32> to vector<16x16x3xf32>
    %26 = vector.shape_cast %25 : vector<16x16x3xf32> to vector<256x3xf32>
    %27 = tpu.concatenate %2, %5, %8, %11, %14, %17, %20, %23, %26 in 1 : vector<256x3xf32>, vector<256x3xf32>, vector<256x3xf32>, vector<256x3xf32>, vector<256x3xf32>, vector<256x3xf32>, vector<256x3xf32>, vector<256x3xf32>, vector<256x3xf32> -> vector<256x27xf32>
    %28 = arith.truncf %27 : vector<256x27xf32> to vector<256x27xbf16>
    %c0_33 = arith.constant 0 : index
    %c0_34 = arith.constant 0 : index
    %29 = vector.load %arg3[%c0_33, %c0_34] : memref<27x16xbf16, #tpu.memory_space<vmem>>, vector<27x16xbf16>
    %cst = arith.constant dense<0.000000e+00> : vector<256x16xf32>
    %30 = tpu.matmul %28, %29, %cst {dimension_numbers = #tpu.dot_dimension_numbers<[1], [0], [0], [1], [0, 0, 1, 1], [], []>} : vector<256x27xbf16>, vector<27x16xbf16>, vector<256x16xf32> -> vector<256x16xf32>
    %c0_35 = arith.constant 0 : index
    %c0_36 = arith.constant 0 : index
    %31 = vector.load %arg4[%c0_35, %c0_36] : memref<1x16xf32, #tpu.memory_space<vmem>>, vector<1x16xf32>
    %32 = vector.broadcast %31 : vector<1x16xf32> to vector<256x16xf32>
    %33 = arith.addf %30, %32 : vector<256x16xf32>
    %cst_37 = arith.constant 0.000000e+00 : f32
    %34 = vector.broadcast %cst_37 : f32 to vector<256x16xf32>
    %35 = arith.maximumf %33, %34 : vector<256x16xf32>
    %36 = vector.shape_cast %35 : vector<256x16xf32> to vector<8x2x8x2x16xf32>
    %37 = vector.extract_strided_slice %36 {offsets = [0, 0, 0, 0, 0], sizes = [8, 1, 8, 2, 16], strides = [1, 1, 1, 1, 1]} : vector<8x2x8x2x16xf32> to vector<8x1x8x2x16xf32>
    %38 = vector.shape_cast %37 : vector<8x1x8x2x16xf32> to vector<8x8x2x16xf32>
    %39 = vector.extract_strided_slice %36 {offsets = [0, 1, 0, 0, 0], sizes = [8, 1, 8, 2, 16], strides = [1, 1, 1, 1, 1]} : vector<8x2x8x2x16xf32> to vector<8x1x8x2x16xf32>
    %40 = vector.shape_cast %39 : vector<8x1x8x2x16xf32> to vector<8x8x2x16xf32>
    %41 = arith.maximumf %38, %40 : vector<8x8x2x16xf32>
    %cst_38 = arith.constant dense<0xFF800000> : vector<8x8x16xf32>
    %42 = vector.multi_reduction <maximumf>, %41, %cst_38 [2] : vector<8x8x2x16xf32> to vector<8x8x16xf32>
    %43 = vector.shape_cast %42 : vector<8x8x16xf32> to vector<64x16xf32>
    %c0_39 = arith.constant 0 : index
    %c0_40 = arith.constant 0 : index
    %c0_41 = arith.constant 0 : index
    %44 = vector.load %arg5[%c0_39, %c0_40, %c0_41] : memref<1x64x16xf32, #tpu.memory_space<vmem>>, vector<1x64x16xf32>
    %45 = vector.shape_cast %44 : vector<1x64x16xf32> to vector<64x16xf32>
    %46 = vector.shape_cast %43 : vector<64x16xf32> to vector<1x64x16xf32>
    tpu.vector_store %arg5[%c0_39, %c0_40, %c0_41], %46 {strides = array<i32>} : memref<1x64x16xf32, #tpu.memory_space<vmem>>, vector<1x64x16xf32>,
    return
  }
  func.func @transform_0(%arg0: i32, %arg1: i32) -> (i32, i32, i32, i32) {
    %c0_i32 = arith.constant 0 : i32
    %c0_i32_0 = arith.constant 0 : i32
    %c0_i32_1 = arith.constant 0 : i32
    %c0_i32_2 = arith.constant 0 : i32
    return %arg0, %c0_i32, %c0_i32_0, %c0_i32_1 : i32, i32, i32, i32
  }
  func.func @transform_1(%arg0: i32, %arg1: i32) -> (i32, i32) {
    %c0_i32 = arith.constant 0 : i32
    %c0_i32_0 = arith.constant 0 : i32
    return %c0_i32, %arg1 : i32, i32
  }
  func.func @transform_2(%arg0: i32, %arg1: i32) -> (i32, i32) {
    %c0_i32 = arith.constant 0 : i32
    %c0_i32_0 = arith.constant 0 : i32
    return %c0_i32, %arg1 : i32, i32
  }
  func.func @transform_3(%arg0: i32, %arg1: i32) -> (i32, i32, i32) {
    %c0_i32 = arith.constant 0 : i32
    %c0_i32_0 = arith.constant 0 : i32
    return %arg0, %c0_i32, %arg1 : i32, i32, i32
  }
}

</mosaic_0001>

<llo_original>
// kernel: tpu_custom_call.1
$region0: #{tpu_custom_call.1}
  #allocation0 [shape = 'u32[]', space=smem, size = 0x4, offset = 0x4, fixed_abs, tag = 'smem constant byte address 0x4 - core index']
  #allocation1 [shape = 'u32[72,128]{1,0:T(1,128)}', space=vmem, size = 0x9000, scoped, tag = 'internal scratch']
  %s0 = inlined_call_operand.vmem [shape: f32[2,18,18,3], index: 0, kind: input, shape index: {}]
  %s1 = inlined_call_operand.vmem [shape: bf16[27,16], index: 1, kind: input, shape index: {}]
  %s2 = inlined_call_operand.vmem [shape: f32[1,16], index: 2, kind: input, shape index: {}]
  %s3 = inlined_call_operand.vmem [shape: f32[2,64,16], index: 3, kind: output, shape index: {}]
  %s4 = sld [smem:[#allocation0]]
  $region45: #{tpu_custom_call.1} parent=0
    _
  %s6 = ssub.s32 1, %s4
  %s7 = scalar_select 0, %s6, %s4
  loop: start=0, step=1, limit=4
  $region2: #{tpu_custom_call.1} parent=0 // loop_pre_header
    _
  $region3: #{tpu_custom_call.1} parent=0 // loop_header
    %s9 = sphi 0, %s13
    %p10 = scmp.ge.s32.totalorder %s9, 4
    %s16 = sphi 0, %s28
    %s17 = sphi 0, %s24
    %s18 = sphi 0, %s16
    %s19 = sphi 0, %s17
    %s20 = sphi 0, %s18
    %s21 = sphi 0, %s19
    %s31 = sphi 0, %s33
    %s34 = sphi 0, %s31
    %s35 = sphi 0, %s34
    %s51 = sphi 0, %s35
    %s57 = sphi 0, %s59
    %s60 = sphi 0, %s57
    %s61 = sphi 0, %s60
    %s77 = sphi 0, %s61
    %s83 = sphi 0, %s85
    %s86 = sphi 0, %s83
    %s87 = sphi 0, %s86
    %s103 = sphi 0, %s87
    %s111 = sphi 0, %s113
    %s114 = sphi 0, %s111
    %s115 = sphi 0, %s114
    %s131 = sphi 0, %s115
  $region4: #{tpu_custom_call.1} parent=0 // loop_header_branch
    %12 = sbr.rel (%p10) target = $region8
  $region5: #{tpu_custom_call.1} parent=0 // loop_body
    %s14 = ssub.s32 %s9, 1
    %s15 = ssub.s32 %s9, 2
    %s22 = sadd.s32 1, %s17
    %p23 = scmp.ge.s32.totalorder %s22, 1
    %s24 = scalar_select %p23, 0, %s22
    %s25 = sadd.s32 1, %s16
    %s26 = scalar_select %p23, %s25, %s16
    %p27 = scmp.ge.s32.totalorder %s26, 2
    %s28 = scalar_select %p27, 0, %s26
    %s29 = ssub.s32 %s16, %s28
    %p30 = scmp.eq.s32.totalorder %s29, 0
    %s32 = sadd.s32 %s31, 1
    %s33 = scalar_select %p30, %s31, %s32
    %p36 = pneg %p30
    %p37 = scmp.eq.s32.totalorder %s9, 1
    %p38 = por %p36, %p37
    %p39 = scmp.ne.s32.totalorder %s31, %s34
    %p40 = scmp.eq.s32.totalorder %s9, 0
    %p41 = por %p39, %p40
    %p42 = scmp.ne.s32.totalorder %s31, %s34
    %p43 = scmp.eq.s32.totalorder %s14, 1
    %p44 = por %p42, %p43
    %p45 = scmp.ne.s32.totalorder %s34, %s35
    %p46 = scmp.eq.s32.totalorder %s14, 0
    %p47 = por %p45, %p46
    %p48 = scmp.ne.s32.totalorder %s34, %s35
    %p49 = scmp.eq.s32.totalorder %s15, 1
    %p50 = por %p48, %p49
    %p52 = scmp.ne.s32.totalorder %s35, %s51
    %p53 = scmp.eq.s32.totalorder %s15, 0
    %p54 = por %p52, %p53
    %s55 = ssub.s32 %s17, %s24
    %p56 = scmp.eq.s32.totalorder %s55, 0
    %s58 = sadd.s32 %s57, 1
    %s59 = scalar_select %p56, %s57, %s58
    %p62 = pneg %p56
    %p63 = scmp.eq.s32.totalorder %s9, 1
    %p64 = por %p62, %p63
    %p65 = scmp.ne.s32.totalorder %s57, %s60
    %p66 = scmp.eq.s32.totalorder %s9, 0
    %p67 = por %p65, %p66
    %p68 = scmp.ne.s32.totalorder %s57, %s60
    %p69 = scmp.eq.s32.totalorder %s14, 1
    %p70 = por %p68, %p69
    %p71 = scmp.ne.s32.totalorder %s60, %s61
    %p72 = scmp.eq.s32.totalorder %s14, 0
    %p73 = por %p71, %p72
    %p74 = scmp.ne.s32.totalorder %s60, %s61
    %p75 = scmp.eq.s32.totalorder %s15, 1
    %p76 = por %p74, %p75
    %p78 = scmp.ne.s32.totalorder %s61, %s77
    %p79 = scmp.eq.s32.totalorder %s15, 0
    %p80 = por %p78, %p79
    %s81 = ssub.s32 %s17, %s24
    %p82 = scmp.eq.s32.totalorder %s81, 0
    %s84 = sadd.s32 %s83, 1
    %s85 = scalar_select %p82, %s83, %s84
    %p88 = pneg %p82
    %p89 = scmp.eq.s32.totalorder %s9, 1
    %p90 = por %p88, %p89
    %p91 = scmp.ne.s32.totalorder %s83, %s86
    %p92 = scmp.eq.s32.totalorder %s9, 0
    %p93 = por %p91, %p92
    %p94 = scmp.ne.s32.totalorder %s83, %s86
    %p95 = scmp.eq.s32.totalorder %s14, 1
    %p96 = por %p94, %p95
    %p97 = scmp.ne.s32.totalorder %s86, %s87
    %p98 = scmp.eq.s32.totalorder %s14, 0
    %p99 = por %p97, %p98
    %p100 = scmp.ne.s32.totalorder %s86, %s87
    %p101 = scmp.eq.s32.totalorder %s15, 1
    %p102 = por %p100, %p101
    %p104 = scmp.ne.s32.totalorder %s87, %s103
    %p105 = scmp.eq.s32.totalorder %s15, 0
    %p106 = por %p104, %p105
    %s107 = ssub.s32 %s16, %s28
    %s108 = ssub.s32 %s17, %s24
    %s109 = sor.u32 %s107, %s108
    %p110 = scmp.eq.s32.totalorder %s109, 0
    %s112 = sadd.s32 %s111, 1
    %s113 = scalar_select %p110, %s111, %s112
    %p116 = pneg %p110
    %p117 = scmp.eq.s32.totalorder %s9, 1
    %p118 = por %p116, %p117
    %p119 = scmp.ne.s32.totalorder %s111, %s114
    %p120 = scmp.eq.s32.totalorder %s9, 0
    %p121 = por %p119, %p120
    %p122 = scmp.ne.s32.totalorder %s111, %s114
    %p123 = scmp.eq.s32.totalorder %s14, 1
    %p124 = por %p122, %p123
    %p125 = scmp.ne.s32.totalorder %s114, %s115
    %p126 = scmp.eq.s32.totalorder %s14, 0
    %p127 = por %p125, %p126
    %p128 = scmp.ne.s32.totalorder %s114, %s115
    %p129 = scmp.eq.s32.totalorder %s15, 1
    %p130 = por %p128, %p129
    %p132 = scmp.ne.s32.totalorder %s115, %s131
    %p133 = scmp.eq.s32.totalorder %s15, 0
    %p134 = por %p132, %p133
    %p135 = scmp.le.s32.totalorder 1, %s9
    %p136 = scmp.lt.s32.totalorder %s9, 3
    %p137 = pnand %p135, %p136
    %p138 = pneg %p137
    // Predicated region
    $region9: #{tpu_custom_call.1} parent=5 // pred_check
      _
    $region10: #{tpu_custom_call.1} parent=5 // pred_check_branch
      %140 = sbr.rel (%p137) target = $region12
    $region11: #{tpu_custom_call.1} parent=5 // pred_region
      %s141 = ssub.s32 %s9, 1
      // Predicated region
      $region13: #{tpu_custom_call.1} parent=11 // pred_check
        %p142 = pneg %p73
      $region14: #{tpu_custom_call.1} parent=11 // pred_check_branch
        %144 = sbr.rel (%p142) target = $region16
      $region15: #{tpu_custom_call.1} parent=11 // pred_region
        %p145 = scmp.lt.s32.totalorder %s19, 0
        %s146 = scalar_select %p145, %s19, 0
        %s147 = smul.addr %s146, 4
        %s148 = scalar_lea.vmem %s1, %s147
      $region16: #{tpu_custom_call.1} parent=11 // pred_fallthru
        _
      // Predicated region
      $region17: #{tpu_custom_call.1} parent=11 // pred_check
        %p149 = pneg %p99
      $region18: #{tpu_custom_call.1} parent=11 // pred_check_branch
        %151 = sbr.rel (%p149) target = $region20
      $region19: #{tpu_custom_call.1} parent=11 // pred_region
        %p152 = scmp.lt.s32.totalorder %s19, 0
        %s153 = scalar_select %p152, %s19, 0
        %s154 = scalar_lea.vmem %s2, %s153
      $region20: #{tpu_custom_call.1} parent=11 // pred_fallthru
        _
    $region12: #{tpu_custom_call.1} parent=5 // pred_fallthru
      _
    %p155 = scmp.lt.s32.totalorder %s9, 2
    // Predicated region
    $region21: #{tpu_custom_call.1} parent=5 // pred_check
      %p156 = pneg %p155
    $region22: #{tpu_custom_call.1} parent=5 // pred_check_branch
      %158 = sbr.rel (%p156) target = $region24
    $region23: #{tpu_custom_call.1} parent=5 // pred_region
      // Predicated region
      $region25: #{tpu_custom_call.1} parent=23 // pred_check
        %p159 = pneg %p41
      $region26: #{tpu_custom_call.1} parent=23 // pred_check_branch
        %161 = sbr.rel (%p159) target = $region28
      $region27: #{tpu_custom_call.1} parent=23 // pred_region
        %p162 = scmp.lt.s32.totalorder %s16, 1
        %s163 = scalar_select %p162, %s16, 1
        %s164 = smul.addr %s163, 54
        %s165 = smul.addr %s164, 8
        %s166 = scalar_lea.vmem %s0, %s165
      $region28: #{tpu_custom_call.1} parent=23 // pred_fallthru
        _
    $region24: #{tpu_custom_call.1} parent=5 // pred_fallthru
      _
    %p167 = scmp.le.s32.totalorder 1, %s9
    %p168 = scmp.lt.s32.totalorder %s9, 3
    %p169 = pnand %p167, %p168
    %p170 = pneg %p169
    // Predicated region
    $region29: #{tpu_custom_call.1} parent=5 // pred_check
      _
    $region30: #{tpu_custom_call.1} parent=5 // pred_check_branch
      %172 = sbr.rel (%p169) target = $region32
    $region31: #{tpu_custom_call.1} parent=5 // pred_region
      %s173 = ssub.s32 %s9, 1
      %p174 = scmp.lt.s32.totalorder %s18, 1
      %s175 = scalar_select %p174, %s18, 1
      %s176 = smul.addr %s175, 54
      %s177 = smul.addr %s176, 8
      %s178 = scalar_lea.vmem %s0, %s177
      %p179 = pneg %p47
      %p180 = pneg %p44
      %p181 = scmp.lt.s32.totalorder %s19, 0
      %s182 = scalar_select %p181, %s19, 0
      %s183 = smul.addr %s182, 4
      %s184 = scalar_lea.vmem %s1, %s183
      %p185 = pneg %p73
      %p186 = pneg %p70
      %p187 = scmp.lt.s32.totalorder %s19, 0
      %s188 = scalar_select %p187, %s19, 0
      %s189 = scalar_lea.vmem %s2, %s188
      %p190 = pneg %p99
      %p191 = pneg %p96
      %p192 = pneg %p127
      %p193 = pneg %p124
      %p194 = scmp.lt.s32.totalorder %s18, 1
      %s195 = scalar_select %p194, %s18, 1
      %p196 = scmp.lt.s32.totalorder %s19, 0
      %s197 = scalar_select %p196, %s19, 0
      %s198 = smul.addr %s195, 8
      %s199 = sadd.s32 %s197, %s198
      %s200 = smul.addr %s199, 8
      %s201 = scalar_lea.vmem %s3, %s200
      %p202 = scmp.lt.s32.totalorder %s18, 1
      %s203 = scalar_select %p202, %s18, 1
      %s204 = smul.addr %s203, 54
      %s205 = smul.addr %s204, 8
      %s206 = scalar_lea.vmem %s0, %s205
      %p207 = scmp.lt.s32.totalorder %s19, 0
      %s208 = scalar_select %p207, %s19, 0
      %s209 = smul.addr %s208, 4
      %s210 = scalar_lea.vmem %s1, %s209
      %p211 = scmp.lt.s32.totalorder %s19, 0
      %s212 = scalar_select %p211, %s19, 0
      %s213 = scalar_lea.vmem %s2, %s212
      %p214 = scmp.lt.s32.totalorder %s18, 1
      %s215 = scalar_select %p214, %s18, 1
      %p216 = scmp.lt.s32.totalorder %s19, 0
      %s217 = scalar_select %p216, %s19, 0
      %s218 = smul.addr %s215, 8
      %s219 = sadd.s32 %s217, %s218
      %s220 = smul.addr %s219, 8
      %s221 = scalar_lea.vmem %s3, %s220
      %v223 = vld [vmem:[%s206] sm:$0xff]
      %v224 = vld [vmem:[%s206 + $0x8] sm:$0xff]
      %v225 = vld [vmem:[%s206 + $0x18] sm:$0xff]
      %v226 = vld [vmem:[%s206 + $0x20] sm:$0xff]
      %v227 = vld [vmem:[%s206 + $0x30] sm:$0xff]
      %v228 = vld [vmem:[%s206 + $0x38] sm:$0xff]
      %v229 = vld [vmem:[%s206 + $0x48] sm:$0xff]
      %v230 = vld [vmem:[%s206 + $0x50] sm:$0xff]
      %v231 = vld [vmem:[%s206 + $0x60] sm:$0xff]
      %v232 = vld [vmem:[%s206 + $0x68] sm:$0xff]
      %v233 = vld [vmem:[%s206 + $0x78] sm:$0xff]
      %v234 = vld [vmem:[%s206 + $0x80] sm:$0xff]
      %v235 = vld [vmem:[%s206 + $0x90] sm:$0xff]
      %v236 = vld [vmem:[%s206 + $0x98] sm:$0xff]
      %v237 = vld [vmem:[%s206 + $0xa8] sm:$0xff]
      %v238 = vld [vmem:[%s206 + $0xb0] sm:$0xff]
      %v239 = vld [vmem:[%s206 + $0xc0] sm:$0xff]
      %v240 = vld [vmem:[%s206 + $0xc8] sm:$0xff]
      %v241 = vld [vmem:[%s206 + $0xd8] sm:$0xff]
      %v242 = vld [vmem:[%s206 + $0xe0] sm:$0xff]
      %v243 = vld [vmem:[%s206 + $0xf0] sm:$0xff]
      %v244 = vld [vmem:[%s206 + $0xf8] sm:$0xff]
      %v245 = vld [vmem:[%s206 + $0x108] sm:$0xff]
      %v246 = vld [vmem:[%s206 + $0x110] sm:$0xff]
      %v247 = vld [vmem:[%s206 + $0x120] sm:$0xff]
      %v248 = vld [vmem:[%s206 + $0x128] sm:$0xff]
      %v249 = vld [vmem:[%s206 + $0x138] sm:$0xff]
      %v250 = vld [vmem:[%s206 + $0x140] sm:$0xff]
      %v251 = vld [vmem:[%s206 + $0x150] sm:$0xff]
      %v252 = vld [vmem:[%s206 + $0x158] sm:$0xff]
      %v253 = vld [vmem:[%s206 + $0x168] sm:$0xff]
      %v254 = vld [vmem:[%s206 + $0x170] sm:$0xff]
      %v255 = vld [vmem:[%s206 + $0x1] sm:$0xff]
      %v256 = vld [vmem:[%s206 + $0x9] sm:$0xff]
      %v257 = vld [vmem:[%s206 + $0x19] sm:$0xff]
      %v258 = vld [vmem:[%s206 + $0x21] sm:$0xff]
      %v259 = vld [vmem:[%s206 + $0x31] sm:$0xff]
      %v260 = vld [vmem:[%s206 + $0x39] sm:$0xff]
      %v261 = vld [vmem:[%s206 + $0x49] sm:$0xff]
      %v262 = vld [vmem:[%s206 + $0x51] sm:$0xff]
      %v263 = vld [vmem:[%s206 + $0x61] sm:$0xff]
      %v264 = vld [vmem:[%s206 + $0x69] sm:$0xff]
      %v265 = vld [vmem:[%s206 + $0x79] sm:$0xff]
      %v266 = vld [vmem:[%s206 + $0x81] sm:$0xff]
      %v267 = vld [vmem:[%s206 + $0x91] sm:$0xff]
      %v268 = vld [vmem:[%s206 + $0x99] sm:$0xff]
      %v269 = vld [vmem:[%s206 + $0xa9] sm:$0xff]
      %v270 = vld [vmem:[%s206 + $0xb1] sm:$0xff]
      %v271 = vld [vmem:[%s206 + $0xc1] sm:$0xff]
      %v272 = vld [vmem:[%s206 + $0xc9] sm:$0xff]
      %v273 = vld [vmem:[%s206 + $0xd9] sm:$0xff]
      %v274 = vld [vmem:[%s206 + $0xe1] sm:$0xff]
      %v275 = vld [vmem:[%s206 + $0xf1] sm:$0xff]
      %v276 = vld [vmem:[%s206 + $0xf9] sm:$0xff]
      %v277 = vld [vmem:[%s206 + $0x109] sm:$0xff]
      %v278 = vld [vmem:[%s206 + $0x111] sm:$0xff]
      %v279 = vld [vmem:[%s206 + $0x121] sm:$0xff]
      %v280 = vld [vmem:[%s206 + $0x129] sm:$0xff]
      %v281 = vld [vmem:[%s206 + $0x139] sm:$0xff]
      %v282 = vld [vmem:[%s206 + $0x141] sm:$0xff]
      %v283 = vld [vmem:[%s206 + $0x151] sm:$0xff]
      %v284 = vld [vmem:[%s206 + $0x159] sm:$0xff]
      %v285 = vld [vmem:[%s206 + $0x169] sm:$0xff]
      %v286 = vld [vmem:[%s206 + $0x171] sm:$0xff]
      %v287 = vld [vmem:[%s206 + $0x2] sm:$0xff]
      %v288 = vld [vmem:[%s206 + $0xa] sm:$0xff]
      %v289 = vld [vmem:[%s206 + $0x1a] sm:$0xff]
      %v290 = vld [vmem:[%s206 + $0x22] sm:$0xff]
      %v291 = vld [vmem:[%s206 + $0x32] sm:$0xff]
      %v292 = vld [vmem:[%s206 + $0x3a] sm:$0xff]
      %v293 = vld [vmem:[%s206 + $0x4a] sm:$0xff]
      %v294 = vld [vmem:[%s206 + $0x52] sm:$0xff]
      %v295 = vld [vmem:[%s206 + $0x62] sm:$0xff]
      %v296 = vld [vmem:[%s206 + $0x6a] sm:$0xff]
      %v297 = vld [vmem:[%s206 + $0x7a] sm:$0xff]
      %v298 = vld [vmem:[%s206 + $0x82] sm:$0xff]
      %v299 = vld [vmem:[%s206 + $0x92] sm:$0xff]
      %v300 = vld [vmem:[%s206 + $0x9a] sm:$0xff]
      %v301 = vld [vmem:[%s206 + $0xaa] sm:$0xff]
      %v302 = vld [vmem:[%s206 + $0xb2] sm:$0xff]
      %v303 = vld [vmem:[%s206 + $0xc2] sm:$0xff]
      %v304 = vld [vmem:[%s206 + $0xca] sm:$0xff]
      %v305 = vld [vmem:[%s206 + $0xda] sm:$0xff]
      %v306 = vld [vmem:[%s206 + $0xe2] sm:$0xff]
      %v307 = vld [vmem:[%s206 + $0xf2] sm:$0xff]
      %v308 = vld [vmem:[%s206 + $0xfa] sm:$0xff]
      %v309 = vld [vmem:[%s206 + $0x10a] sm:$0xff]
      %v310 = vld [vmem:[%s206 + $0x112] sm:$0xff]
      %v311 = vld [vmem:[%s206 + $0x122] sm:$0xff]
      %v312 = vld [vmem:[%s206 + $0x12a] sm:$0xff]
      %v313 = vld [vmem:[%s206 + $0x13a] sm:$0xff]
      %v314 = vld [vmem:[%s206 + $0x142] sm:$0xff]
      %v315 = vld [vmem:[%s206 + $0x152] sm:$0xff]
      %v316 = vld [vmem:[%s206 + $0x15a] sm:$0xff]
      %v317 = vld [vmem:[%s206 + $0x16a] sm:$0xff]
      %v318 = vld [vmem:[%s206 + $0x172] sm:$0xff]
      %s319 = scalar_lea.vmem %s206, 24
      %v320 = vld [vmem:[%s319] sm:$0xff]
      %v321 = vld [vmem:[%s319 + $0x8] sm:$0xff]
      %v322 = vld [vmem:[%s319 + $0x18] sm:$0xff]
      %v323 = vld [vmem:[%s319 + $0x20] sm:$0xff]
      %v324 = vld [vmem:[%s319 + $0x30] sm:$0xff]
      %v325 = vld [vmem:[%s319 + $0x38] sm:$0xff]
      %v326 = vld [vmem:[%s319 + $0x48] sm:$0xff]
      %v327 = vld [vmem:[%s319 + $0x50] sm:$0xff]
      %v328 = vld [vmem:[%s319 + $0x60] sm:$0xff]
      %v329 = vld [vmem:[%s319 + $0x68] sm:$0xff]
      %v330 = vld [vmem:[%s319 + $0x78] sm:$0xff]
      %v331 = vld [vmem:[%s319 + $0x80] sm:$0xff]
      %v332 = vld [vmem:[%s319 + $0x90] sm:$0xff]
      %v333 = vld [vmem:[%s319 + $0x98] sm:$0xff]
      %v334 = vld [vmem:[%s319 + $0xa8] sm:$0xff]
      %v335 = vld [vmem:[%s319 + $0xb0] sm:$0xff]
      %v336 = vld [vmem:[%s319 + $0xc0] sm:$0xff]
      %v337 = vld [vmem:[%s319 + $0xc8] sm:$0xff]
      %v338 = vld [vmem:[%s319 + $0xd8] sm:$0xff]
      %v339 = vld [vmem:[%s319 + $0xe0] sm:$0xff]
      %v340 = vld [vmem:[%s319 + $0xf0] sm:$0xff]
      %v341 = vld [vmem:[%s319 + $0xf8] sm:$0xff]
      %v342 = vld [vmem:[%s319 + $0x108] sm:$0xff]
      %v343 = vld [vmem:[%s319 + $0x110] sm:$0xff]
      %v344 = vld [vmem:[%s319 + $0x120] sm:$0xff]
      %v345 = vld [vmem:[%s319 + $0x128] sm:$0xff]
      %v346 = vld [vmem:[%s319 + $0x138] sm:$0xff]
      %v347 = vld [vmem:[%s319 + $0x140] sm:$0xff]
      %v348 = vld [vmem:[%s319 + $0x150] sm:$0xff]
      %v349 = vld [vmem:[%s319 + $0x158] sm:$0xff]
      %v350 = vld [vmem:[%s319 + $0x168] sm:$0xff]
      %v351 = vld [vmem:[%s319 + $0x170] sm:$0xff]
      %v352 = vld [vmem:[%s319 + $0x1] sm:$0xff]
      %v353 = vld [vmem:[%s319 + $0x9] sm:$0xff]
      %v354 = vld [vmem:[%s319 + $0x19] sm:$0xff]
      %v355 = vld [vmem:[%s319 + $0x21] sm:$0xff]
      %v356 = vld [vmem:[%s319 + $0x31] sm:$0xff]
      %v357 = vld [vmem:[%s319 + $0x39] sm:$0xff]
      %v358 = vld [vmem:[%s319 + $0x49] sm:$0xff]
      %v359 = vld [vmem:[%s319 + $0x51] sm:$0xff]
      %v360 = vld [vmem:[%s319 + $0x61] sm:$0xff]
      %v361 = vld [vmem:[%s319 + $0x69] sm:$0xff]
      %v362 = vld [vmem:[%s319 + $0x79] sm:$0xff]
      %v363 = vld [vmem:[%s319 + $0x81] sm:$0xff]
      %v364 = vld [vmem:[%s319 + $0x91] sm:$0xff]
      %v365 = vld [vmem:[%s319 + $0x99] sm:$0xff]
      %v366 = vld [vmem:[%s319 + $0xa9] sm:$0xff]
      %v367 = vld [vmem:[%s319 + $0xb1] sm:$0xff]
      %v368 = vld [vmem:[%s319 + $0xc1] sm:$0xff]
      %v369 = vld [vmem:[%s319 + $0xc9] sm:$0xff]
      %v370 = vld [vmem:[%s319 + $0xd9] sm:$0xff]
      %v371 = vld [vmem:[%s319 + $0xe1] sm:$0xff]
      %v372 = vld [vmem:[%s319 + $0xf1] sm:$0xff]
      %v373 = vld [vmem:[%s319 + $0xf9] sm:$0xff]
      %v374 = vld [vmem:[%s319 + $0x109] sm:$0xff]
      %v375 = vld [vmem:[%s319 + $0x111] sm:$0xff]
      %v376 = vld [vmem:[%s319 + $0x121] sm:$0xff]
      %v377 = vld [vmem:[%s319 + $0x129] sm:$0xff]
      %v378 = vld [vmem:[%s319 + $0x139] sm:$0xff]
      %v379 = vld [vmem:[%s319 + $0x141] sm:$0xff]
      %v380 = vld [vmem:[%s319 + $0x151] sm:$0xff]
      %v381 = vld [vmem:[%s319 + $0x159] sm:$0xff]
      %v382 = vld [vmem:[%s319 + $0x169] sm:$0xff]
      %v383 = vld [vmem:[%s319 + $0x171] sm:$0xff]
      %v384 = vld [vmem:[%s319 + $0x2] sm:$0xff]
      %v385 = vld [vmem:[%s319 + $0xa] sm:$0xff]
      %v386 = vld [vmem:[%s319 + $0x1a] sm:$0xff]
      %v387 = vld [vmem:[%s319 + $0x22] sm:$0xff]
      %v388 = vld [vmem:[%s319 + $0x32] sm:$0xff]
      %v389 = vld [vmem:[%s319 + $0x3a] sm:$0xff]
      %v390 = vld [vmem:[%s319 + $0x4a] sm:$0xff]
      %v391 = vld [vmem:[%s319 + $0x52] sm:$0xff]
      %v392 = vld [vmem:[%s319 + $0x62] sm:$0xff]
      %v393 = vld [vmem:[%s319 + $0x6a] sm:$0xff]
      %v394 = vld [vmem:[%s319 + $0x7a] sm:$0xff]
      %v395 = vld [vmem:[%s319 + $0x82] sm:$0xff]
      %v396 = vld [vmem:[%s319 + $0x92] sm:$0xff]
      %v397 = vld [vmem:[%s319 + $0x9a] sm:$0xff]
      %v398 = vld [vmem:[%s319 + $0xaa] sm:$0xff]
      %v399 = vld [vmem:[%s319 + $0xb2] sm:$0xff]
      %v400 = vld [vmem:[%s319 + $0xc2] sm:$0xff]
      %v401 = vld [vmem:[%s319 + $0xca] sm:$0xff]
      %v402 = vld [vmem:[%s319 + $0xda] sm:$0xff]
      %v403 = vld [vmem:[%s319 + $0xe2] sm:$0xff]
      %v404 = vld [vmem:[%s319 + $0xf2] sm:$0xff]
      %v405 = vld [vmem:[%s319 + $0xfa] sm:$0xff]
      %v406 = vld [vmem:[%s319 + $0x10a] sm:$0xff]
      %v407 = vld [vmem:[%s319 + $0x112] sm:$0xff]
      %v408 = vld [vmem:[%s319 + $0x122] sm:$0xff]
      %v409 = vld [vmem:[%s319 + $0x12a] sm:$0xff]
      %v410 = vld [vmem:[%s319 + $0x13a] sm:$0xff]
      %v411 = vld [vmem:[%s319 + $0x142] sm:$0xff]
      %v412 = vld [vmem:[%s319 + $0x152] sm:$0xff]
      %v413 = vld [vmem:[%s319 + $0x15a] sm:$0xff]
      %v414 = vld [vmem:[%s319 + $0x16a] sm:$0xff]
      %v415 = vld [vmem:[%s319 + $0x172] sm:$0xff]
      %s416 = scalar_lea.vmem %s206, 48
      %v417 = vld [vmem:[%s416] sm:$0xff]
      %v418 = vld [vmem:[%s416 + $0x8] sm:$0xff]
      %v419 = vld [vmem:[%s416 + $0x18] sm:$0xff]
      %v420 = vld [vmem:[%s416 + $0x20] sm:$0xff]
      %v421 = vld [vmem:[%s416 + $0x30] sm:$0xff]
      %v422 = vld [vmem:[%s416 + $0x38] sm:$0xff]
      %v423 = vld [vmem:[%s416 + $0x48] sm:$0xff]
      %v424 = vld [vmem:[%s416 + $0x50] sm:$0xff]
      %v425 = vld [vmem:[%s416 + $0x60] sm:$0xff]
      %v426 = vld [vmem:[%s416 + $0x68] sm:$0xff]
      %v427 = vld [vmem:[%s416 + $0x78] sm:$0xff]
      %v428 = vld [vmem:[%s416 + $0x80] sm:$0xff]
      %v429 = vld [vmem:[%s416 + $0x90] sm:$0xff]
      %v430 = vld [vmem:[%s416 + $0x98] sm:$0xff]
      %v431 = vld [vmem:[%s416 + $0xa8] sm:$0xff]
      %v432 = vld [vmem:[%s416 + $0xb0] sm:$0xff]
      %v433 = vld [vmem:[%s416 + $0xc0] sm:$0xff]
      %v434 = vld [vmem:[%s416 + $0xc8] sm:$0xff]
      %v435 = vld [vmem:[%s416 + $0xd8] sm:$0xff]
      %v436 = vld [vmem:[%s416 + $0xe0] sm:$0xff]
      %v437 = vld [vmem:[%s416 + $0xf0] sm:$0xff]
      %v438 = vld [vmem:[%s416 + $0xf8] sm:$0xff]
      %v439 = vld [vmem:[%s416 + $0x108] sm:$0xff]
      %v440 = vld [vmem:[%s416 + $0x110] sm:$0xff]
      %v441 = vld [vmem:[%s416 + $0x120] sm:$0xff]
      %v442 = vld [vmem:[%s416 + $0x128] sm:$0xff]
      %v443 = vld [vmem:[%s416 + $0x138] sm:$0xff]
      %v444 = vld [vmem:[%s416 + $0x140] sm:$0xff]
      %v445 = vld [vmem:[%s416 + $0x150] sm:$0xff]
      %v446 = vld [vmem:[%s416 + $0x158] sm:$0xff]
      %v447 = vld [vmem:[%s416 + $0x168] sm:$0xff]
      %v448 = vld [vmem:[%s416 + $0x170] sm:$0xff]
      %v449 = vld [vmem:[%s416 + $0x1] sm:$0xff]
      %v450 = vld [vmem:[%s416 + $0x9] sm:$0xff]
      %v451 = vld [vmem:[%s416 + $0x19] sm:$0xff]
      %v452 = vld [vmem:[%s416 + $0x21] sm:$0xff]
      %v453 = vld [vmem:[%s416 + $0x31] sm:$0xff]
      %v454 = vld [vmem:[%s416 + $0x39] sm:$0xff]
      %v455 = vld [vmem:[%s416 + $0x49] sm:$0xff]
      %v456 = vld [vmem:[%s416 + $0x51] sm:$0xff]
      %v457 = vld [vmem:[%s416 + $0x61] sm:$0xff]
      %v458 = vld [vmem:[%s416 + $0x69] sm:$0xff]
      %v459 = vld [vmem:[%s416 + $0x79] sm:$0xff]
      %v460 = vld [vmem:[%s416 + $0x81] sm:$0xff]
      %v461 = vld [vmem:[%s416 + $0x91] sm:$0xff]
      %v462 = vld [vmem:[%s416 + $0x99] sm:$0xff]
      %v463 = vld [vmem:[%s416 + $0xa9] sm:$0xff]
      %v464 = vld [vmem:[%s416 + $0xb1] sm:$0xff]
      %v465 = vld [vmem:[%s416 + $0xc1] sm:$0xff]
      %v466 = vld [vmem:[%s416 + $0xc9] sm:$0xff]
      %v467 = vld [vmem:[%s416 + $0xd9] sm:$0xff]
      %v468 = vld [vmem:[%s416 + $0xe1] sm:$0xff]
      %v469 = vld [vmem:[%s416 + $0xf1] sm:$0xff]
      %v470 = vld [vmem:[%s416 + $0xf9] sm:$0xff]
      %v471 = vld [vmem:[%s416 + $0x109] sm:$0xff]
      %v472 = vld [vmem:[%s416 + $0x111] sm:$0xff]
      %v473 = vld [vmem:[%s416 + $0x121] sm:$0xff]
      %v474 = vld [vmem:[%s416 + $0x129] sm:$0xff]
      %v475 = vld [vmem:[%s416 + $0x139] sm:$0xff]
      %v476 = vld [vmem:[%s416 + $0x141] sm:$0xff]
      %v477 = vld [vmem:[%s416 + $0x151] sm:$0xff]
      %v478 = vld [vmem:[%s416 + $0x159] sm:$0xff]
      %v479 = vld [vmem:[%s416 + $0x169] sm:$0xff]
      %v480 = vld [vmem:[%s416 + $0x171] sm:$0xff]
      %v481 = vld [vmem:[%s416 + $0x2] sm:$0xff]
      %v482 = vld [vmem:[%s416 + $0xa] sm:$0xff]
      %v483 = vld [vmem:[%s416 + $0x1a] sm:$0xff]
      %v484 = vld [vmem:[%s416 + $0x22] sm:$0xff]
      %v485 = vld [vmem:[%s416 + $0x32] sm:$0xff]
      %v486 = vld [vmem:[%s416 + $0x3a] sm:$0xff]
      %v487 = vld [vmem:[%s416 + $0x4a] sm:$0xff]
      %v488 = vld [vmem:[%s416 + $0x52] sm:$0xff]
      %v489 = vld [vmem:[%s416 + $0x62] sm:$0xff]
      %v490 = vld [vmem:[%s416 + $0x6a] sm:$0xff]
      %v491 = vld [vmem:[%s416 + $0x7a] sm:$0xff]
      %v492 = vld [vmem:[%s416 + $0x82] sm:$0xff]
      %v493 = vld [vmem:[%s416 + $0x92] sm:$0xff]
      %v494 = vld [vmem:[%s416 + $0x9a] sm:$0xff]
      %v495 = vld [vmem:[%s416 + $0xaa] sm:$0xff]
      %v496 = vld [vmem:[%s416 + $0xb2] sm:$0xff]
      %v497 = vld [vmem:[%s416 + $0xc2] sm:$0xff]
      %v498 = vld [vmem:[%s416 + $0xca] sm:$0xff]
      %v499 = vld [vmem:[%s416 + $0xda] sm:$0xff]
      %v500 = vld [vmem:[%s416 + $0xe2] sm:$0xff]
      %v501 = vld [vmem:[%s416 + $0xf2] sm:$0xff]
      %v502 = vld [vmem:[%s416 + $0xfa] sm:$0xff]
      %v503 = vld [vmem:[%s416 + $0x10a] sm:$0xff]
      %v504 = vld [vmem:[%s416 + $0x112] sm:$0xff]
      %v505 = vld [vmem:[%s416 + $0x122] sm:$0xff]
      %v506 = vld [vmem:[%s416 + $0x12a] sm:$0xff]
      %v507 = vld [vmem:[%s416 + $0x13a] sm:$0xff]
      %v508 = vld [vmem:[%s416 + $0x142] sm:$0xff]
      %v509 = vld [vmem:[%s416 + $0x152] sm:$0xff]
      %v510 = vld [vmem:[%s416 + $0x15a] sm:$0xff]
      %v511 = vld [vmem:[%s416 + $0x16a] sm:$0xff]
      %v512 = vld [vmem:[%s416 + $0x172] sm:$0xff]
      %545 = vrot.lane.b32.xlu0 %v255, 3
      %v546 = vpop.permute.xlu0 %545
      %547 = vrot.lane.b32.xlu0 %v256, 3
      %v548 = vpop.permute.xlu0 %547
      %549 = vrot.lane.b32.xlu0 %v257, 3
      %v550 = vpop.permute.xlu0 %549
      %551 = vrot.lane.b32.xlu0 %v258, 3
      %v552 = vpop.permute.xlu0 %551
      %553 = vrot.lane.b32.xlu0 %v259, 3
      %v554 = vpop.permute.xlu0 %553
      %555 = vrot.lane.b32.xlu0 %v260, 3
      %v556 = vpop.permute.xlu0 %555
      %557 = vrot.lane.b32.xlu0 %v261, 3
      %v558 = vpop.permute.xlu0 %557
      %559 = vrot.lane.b32.xlu0 %v262, 3
      %v560 = vpop.permute.xlu0 %559
      %561 = vrot.lane.b32.xlu0 %v263, 3
      %v562 = vpop.permute.xlu0 %561
      %563 = vrot.lane.b32.xlu0 %v264, 3
      %v564 = vpop.permute.xlu0 %563
      %565 = vrot.lane.b32.xlu0 %v265, 3
      %v566 = vpop.permute.xlu0 %565
      %567 = vrot.lane.b32.xlu0 %v266, 3
      %v568 = vpop.permute.xlu0 %567
      %569 = vrot.lane.b32.xlu0 %v267, 3
      %v570 = vpop.permute.xlu0 %569
      %571 = vrot.lane.b32.xlu0 %v268, 3
      %v572 = vpop.permute.xlu0 %571
      %573 = vrot.lane.b32.xlu0 %v269, 3
      %v574 = vpop.permute.xlu0 %573
      %575 = vrot.lane.b32.xlu0 %v270, 3
      %v576 = vpop.permute.xlu0 %575
      %577 = vrot.lane.b32.xlu0 %v271, 3
      %v578 = vpop.permute.xlu0 %577
      %579 = vrot.lane.b32.xlu0 %v272, 3
      %v580 = vpop.permute.xlu0 %579
      %581 = vrot.lane.b32.xlu0 %v273, 3
      %v582 = vpop.permute.xlu0 %581
      %583 = vrot.lane.b32.xlu0 %v274, 3
      %v584 = vpop.permute.xlu0 %583
      %585 = vrot.lane.b32.xlu0 %v275, 3
      %v586 = vpop.permute.xlu0 %585
      %587 = vrot.lane.b32.xlu0 %v276, 3
      %v588 = vpop.permute.xlu0 %587
      %589 = vrot.lane.b32.xlu0 %v277, 3
      %v590 = vpop.permute.xlu0 %589
      %591 = vrot.lane.b32.xlu0 %v278, 3
      %v592 = vpop.permute.xlu0 %591
      %593 = vrot.lane.b32.xlu0 %v279, 3
      %v594 = vpop.permute.xlu0 %593
      %595 = vrot.lane.b32.xlu0 %v280, 3
      %v596 = vpop.permute.xlu0 %595
      %597 = vrot.lane.b32.xlu0 %v281, 3
      %v598 = vpop.permute.xlu0 %597
      %599 = vrot.lane.b32.xlu0 %v282, 3
      %v600 = vpop.permute.xlu0 %599
      %601 = vrot.lane.b32.xlu0 %v283, 3
      %v602 = vpop.permute.xlu0 %601
      %603 = vrot.lane.b32.xlu0 %v284, 3
      %v604 = vpop.permute.xlu0 %603
      %605 = vrot.lane.b32.xlu0 %v285, 3
      %v606 = vpop.permute.xlu0 %605
      %607 = vrot.lane.b32.xlu0 %v286, 3
      %v608 = vpop.permute.xlu0 %607
      %673 = vrot.lane.b32.xlu0 %v287, 6
      %v674 = vpop.permute.xlu0 %673
      %675 = vrot.lane.b32.xlu0 %v288, 6
      %v676 = vpop.permute.xlu0 %675
      %677 = vrot.lane.b32.xlu0 %v289, 6
      %v678 = vpop.permute.xlu0 %677
      %679 = vrot.lane.b32.xlu0 %v290, 6
      %v680 = vpop.permute.xlu0 %679
      %681 = vrot.lane.b32.xlu0 %v291, 6
      %v682 = vpop.permute.xlu0 %681
      %683 = vrot.lane.b32.xlu0 %v292, 6
      %v684 = vpop.permute.xlu0 %683
      %685 = vrot.lane.b32.xlu0 %v293, 6
      %v686 = vpop.permute.xlu0 %685
      %687 = vrot.lane.b32.xlu0 %v294, 6
      %v688 = vpop.permute.xlu0 %687
      %689 = vrot.lane.b32.xlu0 %v295, 6
      %v690 = vpop.permute.xlu0 %689
      %691 = vrot.lane.b32.xlu0 %v296, 6
      %v692 = vpop.permute.xlu0 %691
      %693 = vrot.lane.b32.xlu0 %v297, 6
      %v694 = vpop.permute.xlu0 %693
      %695 = vrot.lane.b32.xlu0 %v298, 6
      %v696 = vpop.permute.xlu0 %695
      %697 = vrot.lane.b32.xlu0 %v299, 6
      %v698 = vpop.permute.xlu0 %697
      %699 = vrot.lane.b32.xlu0 %v300, 6
      %v700 = vpop.permute.xlu0 %699
      %701 = vrot.lane.b32.xlu0 %v301, 6
      %v702 = vpop.permute.xlu0 %701
      %703 = vrot.lane.b32.xlu0 %v302, 6
      %v704 = vpop.permute.xlu0 %703
      %705 = vrot.lane.b32.xlu0 %v303, 6
      %v706 = vpop.permute.xlu0 %705
      %707 = vrot.lane.b32.xlu0 %v304, 6
      %v708 = vpop.permute.xlu0 %707
      %709 = vrot.lane.b32.xlu0 %v305, 6
      %v710 = vpop.permute.xlu0 %709
      %711 = vrot.lane.b32.xlu0 %v306, 6
      %v712 = vpop.permute.xlu0 %711
      %713 = vrot.lane.b32.xlu0 %v307, 6
      %v714 = vpop.permute.xlu0 %713
      %715 = vrot.lane.b32.xlu0 %v308, 6
      %v716 = vpop.permute.xlu0 %715
      %717 = vrot.lane.b32.xlu0 %v309, 6
      %v718 = vpop.permute.xlu0 %717
      %719 = vrot.lane.b32.xlu0 %v310, 6
      %v720 = vpop.permute.xlu0 %719
      %721 = vrot.lane.b32.xlu0 %v311, 6
      %v722 = vpop.permute.xlu0 %721
      %723 = vrot.lane.b32.xlu0 %v312, 6
      %v724 = vpop.permute.xlu0 %723
      %725 = vrot.lane.b32.xlu0 %v313, 6
      %v726 = vpop.permute.xlu0 %725
      %727 = vrot.lane.b32.xlu0 %v314, 6
      %v728 = vpop.permute.xlu0 %727
      %729 = vrot.lane.b32.xlu0 %v315, 6
      %v730 = vpop.permute.xlu0 %729
      %731 = vrot.lane.b32.xlu0 %v316, 6
      %v732 = vpop.permute.xlu0 %731
      %733 = vrot.lane.b32.xlu0 %v317, 6
      %v734 = vpop.permute.xlu0 %733
      %735 = vrot.lane.b32.xlu0 %v318, 6
      %v736 = vpop.permute.xlu0 %735
      %801 = vrot.lane.b32.xlu0 %v320, 9
      %v802 = vpop.permute.xlu0 %801
      %803 = vrot.lane.b32.xlu0 %v321, 9
      %v804 = vpop.permute.xlu0 %803
      %805 = vrot.lane.b32.xlu0 %v322, 9
      %v806 = vpop.permute.xlu0 %805
      %807 = vrot.lane.b32.xlu0 %v323, 9
      %v808 = vpop.permute.xlu0 %807
      %809 = vrot.lane.b32.xlu0 %v324, 9
      %v810 = vpop.permute.xlu0 %809
      %811 = vrot.lane.b32.xlu0 %v325, 9
      %v812 = vpop.permute.xlu0 %811
      %813 = vrot.lane.b32.xlu0 %v326, 9
      %v814 = vpop.permute.xlu0 %813
      %815 = vrot.lane.b32.xlu0 %v327, 9
      %v816 = vpop.permute.xlu0 %815
      %817 = vrot.lane.b32.xlu0 %v328, 9
      %v818 = vpop.permute.xlu0 %817
      %819 = vrot.lane.b32.xlu0 %v329, 9
      %v820 = vpop.permute.xlu0 %819
      %821 = vrot.lane.b32.xlu0 %v330, 9
      %v822 = vpop.permute.xlu0 %821
      %823 = vrot.lane.b32.xlu0 %v331, 9
      %v824 = vpop.permute.xlu0 %823
      %825 = vrot.lane.b32.xlu0 %v332, 9
      %v826 = vpop.permute.xlu0 %825
      %827 = vrot.lane.b32.xlu0 %v333, 9
      %v828 = vpop.permute.xlu0 %827
      %829 = vrot.lane.b32.xlu0 %v334, 9
      %v830 = vpop.permute.xlu0 %829
      %831 = vrot.lane.b32.xlu0 %v335, 9
      %v832 = vpop.permute.xlu0 %831
      %833 = vrot.lane.b32.xlu0 %v336, 9
      %v834 = vpop.permute.xlu0 %833
      %835 = vrot.lane.b32.xlu0 %v337, 9
      %v836 = vpop.permute.xlu0 %835
      %837 = vrot.lane.b32.xlu0 %v338, 9
      %v838 = vpop.permute.xlu0 %837
      %839 = vrot.lane.b32.xlu0 %v339, 9
      %v840 = vpop.permute.xlu0 %839
      %841 = vrot.lane.b32.xlu0 %v340, 9
      %v842 = vpop.permute.xlu0 %841
      %843 = vrot.lane.b32.xlu0 %v341, 9
      %v844 = vpop.permute.xlu0 %843
      %845 = vrot.lane.b32.xlu0 %v342, 9
      %v846 = vpop.permute.xlu0 %845
      %847 = vrot.lane.b32.xlu0 %v343, 9
      %v848 = vpop.permute.xlu0 %847
      %849 = vrot.lane.b32.xlu0 %v344, 9
      %v850 = vpop.permute.xlu0 %849
      %851 = vrot.lane.b32.xlu0 %v345, 9
      %v852 = vpop.permute.xlu0 %851
      %853 = vrot.lane.b32.xlu0 %v346, 9
      %v854 = vpop.permute.xlu0 %853
      %855 = vrot.lane.b32.xlu0 %v347, 9
      %v856 = vpop.permute.xlu0 %855
      %857 = vrot.lane.b32.xlu0 %v348, 9
      %v858 = vpop.permute.xlu0 %857
      %859 = vrot.lane.b32.xlu0 %v349, 9
      %v860 = vpop.permute.xlu0 %859
      %861 = vrot.lane.b32.xlu0 %v350, 9
      %v862 = vpop.permute.xlu0 %861
      %863 = vrot.lane.b32.xlu0 %v351, 9
      %v864 = vpop.permute.xlu0 %863
      %929 = vrot.lane.b32.xlu0 %v352, 12
      %v930 = vpop.permute.xlu0 %929
      %931 = vrot.lane.b32.xlu0 %v353, 12
      %v932 = vpop.permute.xlu0 %931
      %933 = vrot.lane.b32.xlu0 %v354, 12
      %v934 = vpop.permute.xlu0 %933
      %935 = vrot.lane.b32.xlu0 %v355, 12
      %v936 = vpop.permute.xlu0 %935
      %937 = vrot.lane.b32.xlu0 %v356, 12
      %v938 = vpop.permute.xlu0 %937
      %939 = vrot.lane.b32.xlu0 %v357, 12
      %v940 = vpop.permute.xlu0 %939
      %941 = vrot.lane.b32.xlu0 %v358, 12
      %v942 = vpop.permute.xlu0 %941
      %943 = vrot.lane.b32.xlu0 %v359, 12
      %v944 = vpop.permute.xlu0 %943
      %945 = vrot.lane.b32.xlu0 %v360, 12
      %v946 = vpop.permute.xlu0 %945
      %947 = vrot.lane.b32.xlu0 %v361, 12
      %v948 = vpop.permute.xlu0 %947
      %949 = vrot.lane.b32.xlu0 %v362, 12
      %v950 = vpop.permute.xlu0 %949
      %951 = vrot.lane.b32.xlu0 %v363, 12
      %v952 = vpop.permute.xlu0 %951
      %953 = vrot.lane.b32.xlu0 %v364, 12
      %v954 = vpop.permute.xlu0 %953
      %955 = vrot.lane.b32.xlu0 %v365, 12
      %v956 = vpop.permute.xlu0 %955
      %957 = vrot.lane.b32.xlu0 %v366, 12
      %v958 = vpop.permute.xlu0 %957
      %959 = vrot.lane.b32.xlu0 %v367, 12
      %v960 = vpop.permute.xlu0 %959
      %961 = vrot.lane.b32.xlu0 %v368, 12
      %v962 = vpop.permute.xlu0 %961
      %963 = vrot.lane.b32.xlu0 %v369, 12
      %v964 = vpop.permute.xlu0 %963
      %965 = vrot.lane.b32.xlu0 %v370, 12
      %v966 = vpop.permute.xlu0 %965
      %967 = vrot.lane.b32.xlu0 %v371, 12
      %v968 = vpop.permute.xlu0 %967
      %969 = vrot.lane.b32.xlu0 %v372, 12
      %v970 = vpop.permute.xlu0 %969
      %971 = vrot.lane.b32.xlu0 %v373, 12
      %v972 = vpop.permute.xlu0 %971
      %973 = vrot.lane.b32.xlu0 %v374, 12
      %v974 = vpop.permute.xlu0 %973
      %975 = vrot.lane.b32.xlu0 %v375, 12
      %v976 = vpop.permute.xlu0 %975
      %977 = vrot.lane.b32.xlu0 %v376, 12
      %v978 = vpop.permute.xlu0 %977
      %979 = vrot.lane.b32.xlu0 %v377, 12
      %v980 = vpop.permute.xlu0 %979
      %981 = vrot.lane.b32.xlu0 %v378, 12
      %v982 = vpop.permute.xlu0 %981
      %983 = vrot.lane.b32.xlu0 %v379, 12
      %v984 = vpop.permute.xlu0 %983
      %985 = vrot.lane.b32.xlu0 %v380, 12
      %v986 = vpop.permute.xlu0 %985
      %987 = vrot.lane.b32.xlu0 %v381, 12
      %v988 = vpop.permute.xlu0 %987
      %989 = vrot.lane.b32.xlu0 %v382, 12
      %v990 = vpop.permute.xlu0 %989
      %991 = vrot.lane.b32.xlu0 %v383, 12
      %v992 = vpop.permute.xlu0 %991
      %1057 = vrot.lane.b32.xlu0 %v384, 15
      %v1058 = vpop.permute.xlu0 %1057
      %1059 = vrot.lane.b32.xlu0 %v385, 15
      %v1060 = vpop.permute.xlu0 %1059
      %1061 = vrot.lane.b32.xlu0 %v386, 15
      %v1062 = vpop.permute.xlu0 %1061
      %1063 = vrot.lane.b32.xlu0 %v387, 15
      %v1064 = vpop.permute.xlu0 %1063
      %1065 = vrot.lane.b32.xlu0 %v388, 15
      %v1066 = vpop.permute.xlu0 %1065
      %1067 = vrot.lane.b32.xlu0 %v389, 15
      %v1068 = vpop.permute.xlu0 %1067
      %1069 = vrot.lane.b32.xlu0 %v390, 15
      %v1070 = vpop.permute.xlu0 %1069
      %1071 = vrot.lane.b32.xlu0 %v391, 15
      %v1072 = vpop.permute.xlu0 %1071
      %1073 = vrot.lane.b32.xlu0 %v392, 15
      %v1074 = vpop.permute.xlu0 %1073
      %1075 = vrot.lane.b32.xlu0 %v393, 15
      %v1076 = vpop.permute.xlu0 %1075
      %1077 = vrot.lane.b32.xlu0 %v394, 15
      %v1078 = vpop.permute.xlu0 %1077
      %1079 = vrot.lane.b32.xlu0 %v395, 15
      %v1080 = vpop.permute.xlu0 %1079
      %1081 = vrot.lane.b32.xlu0 %v396, 15
      %v1082 = vpop.permute.xlu0 %1081
      %1083 = vrot.lane.b32.xlu0 %v397, 15
      %v1084 = vpop.permute.xlu0 %1083
      %1085 = vrot.lane.b32.xlu0 %v398, 15
      %v1086 = vpop.permute.xlu0 %1085
      %1087 = vrot.lane.b32.xlu0 %v399, 15
      %v1088 = vpop.permute.xlu0 %1087
      %1089 = vrot.lane.b32.xlu0 %v400, 15
      %v1090 = vpop.permute.xlu0 %1089
      %1091 = vrot.lane.b32.xlu0 %v401, 15
      %v1092 = vpop.permute.xlu0 %1091
      %1093 = vrot.lane.b32.xlu0 %v402, 15
      %v1094 = vpop.permute.xlu0 %1093
      %1095 = vrot.lane.b32.xlu0 %v403, 15
      %v1096 = vpop.permute.xlu0 %1095
      %1097 = vrot.lane.b32.xlu0 %v404, 15
      %v1098 = vpop.permute.xlu0 %1097
      %1099 = vrot.lane.b32.xlu0 %v405, 15
      %v1100 = vpop.permute.xlu0 %1099
      %1101 = vrot.lane.b32.xlu0 %v406, 15
      %v1102 = vpop.permute.xlu0 %1101
      %1103 = vrot.lane.b32.xlu0 %v407, 15
      %v1104 = vpop.permute.xlu0 %1103
      %1105 = vrot.lane.b32.xlu0 %v408, 15
      %v1106 = vpop.permute.xlu0 %1105
      %1107 = vrot.lane.b32.xlu0 %v409, 15
      %v1108 = vpop.permute.xlu0 %1107
      %1109 = vrot.lane.b32.xlu0 %v410, 15
      %v1110 = vpop.permute.xlu0 %1109
      %1111 = vrot.lane.b32.xlu0 %v411, 15
      %v1112 = vpop.permute.xlu0 %1111
      %1113 = vrot.lane.b32.xlu0 %v412, 15
      %v1114 = vpop.permute.xlu0 %1113
      %1115 = vrot.lane.b32.xlu0 %v413, 15
      %v1116 = vpop.permute.xlu0 %1115
      %1117 = vrot.lane.b32.xlu0 %v414, 15
      %v1118 = vpop.permute.xlu0 %1117
      %1119 = vrot.lane.b32.xlu0 %v415, 15
      %v1120 = vpop.permute.xlu0 %1119
      %1185 = vrot.lane.b32.xlu0 %v417, 18
      %v1186 = vpop.permute.xlu0 %1185
      %1187 = vrot.lane.b32.xlu0 %v418, 18
      %v1188 = vpop.permute.xlu0 %1187
      %1189 = vrot.lane.b32.xlu0 %v419, 18
      %v1190 = vpop.permute.xlu0 %1189
      %1191 = vrot.lane.b32.xlu0 %v420, 18
      %v1192 = vpop.permute.xlu0 %1191
      %1193 = vrot.lane.b32.xlu0 %v421, 18
      %v1194 = vpop.permute.xlu0 %1193
      %1195 = vrot.lane.b32.xlu0 %v422, 18
      %v1196 = vpop.permute.xlu0 %1195
      %1197 = vrot.lane.b32.xlu0 %v423, 18
      %v1198 = vpop.permute.xlu0 %1197
      %1199 = vrot.lane.b32.xlu0 %v424, 18
      %v1200 = vpop.permute.xlu0 %1199
      %1201 = vrot.lane.b32.xlu0 %v425, 18
      %v1202 = vpop.permute.xlu0 %1201
      %1203 = vrot.lane.b32.xlu0 %v426, 18
      %v1204 = vpop.permute.xlu0 %1203
      %1205 = vrot.lane.b32.xlu0 %v427, 18
      %v1206 = vpop.permute.xlu0 %1205
      %1207 = vrot.lane.b32.xlu0 %v428, 18
      %v1208 = vpop.permute.xlu0 %1207
      %1209 = vrot.lane.b32.xlu0 %v429, 18
      %v1210 = vpop.permute.xlu0 %1209
      %1211 = vrot.lane.b32.xlu0 %v430, 18
      %v1212 = vpop.permute.xlu0 %1211
      %1213 = vrot.lane.b32.xlu0 %v431, 18
      %v1214 = vpop.permute.xlu0 %1213
      %1215 = vrot.lane.b32.xlu0 %v432, 18
      %v1216 = vpop.permute.xlu0 %1215
      %1217 = vrot.lane.b32.xlu0 %v433, 18
      %v1218 = vpop.permute.xlu0 %1217
      %1219 = vrot.lane.b32.xlu0 %v434, 18
      %v1220 = vpop.permute.xlu0 %1219
      %1221 = vrot.lane.b32.xlu0 %v435, 18
      %v1222 = vpop.permute.xlu0 %1221
      %1223 = vrot.lane.b32.xlu0 %v436, 18
      %v1224 = vpop.permute.xlu0 %1223
      %1225 = vrot.lane.b32.xlu0 %v437, 18
      %v1226 = vpop.permute.xlu0 %1225
      %1227 = vrot.lane.b32.xlu0 %v438, 18
      %v1228 = vpop.permute.xlu0 %1227
      %1229 = vrot.lane.b32.xlu0 %v439, 18
      %v1230 = vpop.permute.xlu0 %1229
      %1231 = vrot.lane.b32.xlu0 %v440, 18
      %v1232 = vpop.permute.xlu0 %1231
      %1233 = vrot.lane.b32.xlu0 %v441, 18
      %v1234 = vpop.permute.xlu0 %1233
      %1235 = vrot.lane.b32.xlu0 %v442, 18
      %v1236 = vpop.permute.xlu0 %1235
      %1237 = vrot.lane.b32.xlu0 %v443, 18
      %v1238 = vpop.permute.xlu0 %1237
      %1239 = vrot.lane.b32.xlu0 %v444, 18
      %v1240 = vpop.permute.xlu0 %1239
      %1241 = vrot.lane.b32.xlu0 %v445, 18
      %v1242 = vpop.permute.xlu0 %1241
      %1243 = vrot.lane.b32.xlu0 %v446, 18
      %v1244 = vpop.permute.xlu0 %1243
      %1245 = vrot.lane.b32.xlu0 %v447, 18
      %v1246 = vpop.permute.xlu0 %1245
      %1247 = vrot.lane.b32.xlu0 %v448, 18
      %v1248 = vpop.permute.xlu0 %1247
      %1313 = vrot.lane.b32.xlu0 %v449, 21
      %v1314 = vpop.permute.xlu0 %1313
      %1315 = vrot.lane.b32.xlu0 %v450, 21
      %v1316 = vpop.permute.xlu0 %1315
      %1317 = vrot.lane.b32.xlu0 %v451, 21
      %v1318 = vpop.permute.xlu0 %1317
      %1319 = vrot.lane.b32.xlu0 %v452, 21
      %v1320 = vpop.permute.xlu0 %1319
      %1321 = vrot.lane.b32.xlu0 %v453, 21
      %v1322 = vpop.permute.xlu0 %1321
      %1323 = vrot.lane.b32.xlu0 %v454, 21
      %v1324 = vpop.permute.xlu0 %1323
      %1325 = vrot.lane.b32.xlu0 %v455, 21
      %v1326 = vpop.permute.xlu0 %1325
      %1327 = vrot.lane.b32.xlu0 %v456, 21
      %v1328 = vpop.permute.xlu0 %1327
      %1329 = vrot.lane.b32.xlu0 %v457, 21
      %v1330 = vpop.permute.xlu0 %1329
      %1331 = vrot.lane.b32.xlu0 %v458, 21
      %v1332 = vpop.permute.xlu0 %1331
      %1333 = vrot.lane.b32.xlu0 %v459, 21
      %v1334 = vpop.permute.xlu0 %1333
      %1335 = vrot.lane.b32.xlu0 %v460, 21
      %v1336 = vpop.permute.xlu0 %1335
      %1337 = vrot.lane.b32.xlu0 %v461, 21
      %v1338 = vpop.permute.xlu0 %1337
      %1339 = vrot.lane.b32.xlu0 %v462, 21
      %v1340 = vpop.permute.xlu0 %1339
      %1341 = vrot.lane.b32.xlu0 %v463, 21
      %v1342 = vpop.permute.xlu0 %1341
      %1343 = vrot.lane.b32.xlu0 %v464, 21
      %v1344 = vpop.permute.xlu0 %1343
      %1345 = vrot.lane.b32.xlu0 %v465, 21
      %v1346 = vpop.permute.xlu0 %1345
      %1347 = vrot.lane.b32.xlu0 %v466, 21
      %v1348 = vpop.permute.xlu0 %1347
      %1349 = vrot.lane.b32.xlu0 %v467, 21
      %v1350 = vpop.permute.xlu0 %1349
      %1351 = vrot.lane.b32.xlu0 %v468, 21
      %v1352 = vpop.permute.xlu0 %1351
      %1353 = vrot.lane.b32.xlu0 %v469, 21
      %v1354 = vpop.permute.xlu0 %1353
      %1355 = vrot.lane.b32.xlu0 %v470, 21
      %v1356 = vpop.permute.xlu0 %1355
      %1357 = vrot.lane.b32.xlu0 %v471, 21
      %v1358 = vpop.permute.xlu0 %1357
      %1359 = vrot.lane.b32.xlu0 %v472, 21
      %v1360 = vpop.permute.xlu0 %1359
      %1361 = vrot.lane.b32.xlu0 %v473, 21
      %v1362 = vpop.permute.xlu0 %1361
      %1363 = vrot.lane.b32.xlu0 %v474, 21
      %v1364 = vpop.permute.xlu0 %1363
      %1365 = vrot.lane.b32.xlu0 %v475, 21
      %v1366 = vpop.permute.xlu0 %1365
      %1367 = vrot.lane.b32.xlu0 %v476, 21
      %v1368 = vpop.permute.xlu0 %1367
      %1369 = vrot.lane.b32.xlu0 %v477, 21
      %v1370 = vpop.permute.xlu0 %1369
      %1371 = vrot.lane.b32.xlu0 %v478, 21
      %v1372 = vpop.permute.xlu0 %1371
      %1373 = vrot.lane.b32.xlu0 %v479, 21
      %v1374 = vpop.permute.xlu0 %1373
      %1375 = vrot.lane.b32.xlu0 %v480, 21
      %v1376 = vpop.permute.xlu0 %1375
      %1441 = vrot.lane.b32.xlu0 %v481, 24
      %v1442 = vpop.permute.xlu0 %1441
      %1443 = vrot.lane.b32.xlu0 %v482, 24
      %v1444 = vpop.permute.xlu0 %1443
      %1445 = vrot.lane.b32.xlu0 %v483, 24
      %v1446 = vpop.permute.xlu0 %1445
      %1447 = vrot.lane.b32.xlu0 %v484, 24
      %v1448 = vpop.permute.xlu0 %1447
      %1449 = vrot.lane.b32.xlu0 %v485, 24
      %v1450 = vpop.permute.xlu0 %1449
      %1451 = vrot.lane.b32.xlu0 %v486, 24
      %v1452 = vpop.permute.xlu0 %1451
      %1453 = vrot.lane.b32.xlu0 %v487, 24
      %v1454 = vpop.permute.xlu0 %1453
      %1455 = vrot.lane.b32.xlu0 %v488, 24
      %v1456 = vpop.permute.xlu0 %1455
      %1457 = vrot.lane.b32.xlu0 %v489, 24
      %v1458 = vpop.permute.xlu0 %1457
      %1459 = vrot.lane.b32.xlu0 %v490, 24
      %v1460 = vpop.permute.xlu0 %1459
      %1461 = vrot.lane.b32.xlu0 %v491, 24
      %v1462 = vpop.permute.xlu0 %1461
      %1463 = vrot.lane.b32.xlu0 %v492, 24
      %v1464 = vpop.permute.xlu0 %1463
      %1465 = vrot.lane.b32.xlu0 %v493, 24
      %v1466 = vpop.permute.xlu0 %1465
      %1467 = vrot.lane.b32.xlu0 %v494, 24
      %v1468 = vpop.permute.xlu0 %1467
      %1469 = vrot.lane.b32.xlu0 %v495, 24
      %v1470 = vpop.permute.xlu0 %1469
      %1471 = vrot.lane.b32.xlu0 %v496, 24
      %v1472 = vpop.permute.xlu0 %1471
      %1473 = vrot.lane.b32.xlu0 %v497, 24
      %v1474 = vpop.permute.xlu0 %1473
      %1475 = vrot.lane.b32.xlu0 %v498, 24
      %v1476 = vpop.permute.xlu0 %1475
      %1477 = vrot.lane.b32.xlu0 %v499, 24
      %v1478 = vpop.permute.xlu0 %1477
      %1479 = vrot.lane.b32.xlu0 %v500, 24
      %v1480 = vpop.permute.xlu0 %1479
      %1481 = vrot.lane.b32.xlu0 %v501, 24
      %v1482 = vpop.permute.xlu0 %1481
      %1483 = vrot.lane.b32.xlu0 %v502, 24
      %v1484 = vpop.permute.xlu0 %1483
      %1485 = vrot.lane.b32.xlu0 %v503, 24
      %v1486 = vpop.permute.xlu0 %1485
      %1487 = vrot.lane.b32.xlu0 %v504, 24
      %v1488 = vpop.permute.xlu0 %1487
      %1489 = vrot.lane.b32.xlu0 %v505, 24
      %v1490 = vpop.permute.xlu0 %1489
      %1491 = vrot.lane.b32.xlu0 %v506, 24
      %v1492 = vpop.permute.xlu0 %1491
      %1493 = vrot.lane.b32.xlu0 %v507, 24
      %v1494 = vpop.permute.xlu0 %1493
      %1495 = vrot.lane.b32.xlu0 %v508, 24
      %v1496 = vpop.permute.xlu0 %1495
      %1497 = vrot.lane.b32.xlu0 %v509, 24
      %v1498 = vpop.permute.xlu0 %1497
      %1499 = vrot.lane.b32.xlu0 %v510, 24
      %v1500 = vpop.permute.xlu0 %1499
      %1501 = vrot.lane.b32.xlu0 %v511, 24
      %v1502 = vpop.permute.xlu0 %1501
      %1503 = vrot.lane.b32.xlu0 %v512, 24
      %v1504 = vpop.permute.xlu0 %1503
      %vm1537 = vcmask 23552
      %v1538 = vsel %vm1537, %v223, %v546
      %v1539 = vsel %vm1537, %v224, %v548
      %v1540 = vsel %vm1537, %v225, %v550
      %v1541 = vsel %vm1537, %v226, %v552
      %v1542 = vsel %vm1537, %v227, %v554
      %v1543 = vsel %vm1537, %v228, %v556
      %v1544 = vsel %vm1537, %v229, %v558
      %v1545 = vsel %vm1537, %v230, %v560
      %v1546 = vsel %vm1537, %v231, %v562
      %v1547 = vsel %vm1537, %v232, %v564
      %v1548 = vsel %vm1537, %v233, %v566
      %v1549 = vsel %vm1537, %v234, %v568
      %v1550 = vsel %vm1537, %v235, %v570
      %v1551 = vsel %vm1537, %v236, %v572
      %v1552 = vsel %vm1537, %v237, %v574
      %v1553 = vsel %vm1537, %v238, %v576
      %v1554 = vsel %vm1537, %v239, %v578
      %v1555 = vsel %vm1537, %v240, %v580
      %v1556 = vsel %vm1537, %v241, %v582
      %v1557 = vsel %vm1537, %v242, %v584
      %v1558 = vsel %vm1537, %v243, %v586
      %v1559 = vsel %vm1537, %v244, %v588
      %v1560 = vsel %vm1537, %v245, %v590
      %v1561 = vsel %vm1537, %v246, %v592
      %v1562 = vsel %vm1537, %v247, %v594
      %v1563 = vsel %vm1537, %v248, %v596
      %v1564 = vsel %vm1537, %v249, %v598
      %v1565 = vsel %vm1537, %v250, %v600
      %v1566 = vsel %vm1537, %v251, %v602
      %v1567 = vsel %vm1537, %v252, %v604
      %v1568 = vsel %vm1537, %v253, %v606
      %v1569 = vsel %vm1537, %v254, %v608
      %vm1570 = vcmask 48128
      %v1571 = vsel %vm1570, %v1538, %v674
      %v1572 = vsel %vm1570, %v1539, %v676
      %v1573 = vsel %vm1570, %v1540, %v678
      %v1574 = vsel %vm1570, %v1541, %v680
      %v1575 = vsel %vm1570, %v1542, %v682
      %v1576 = vsel %vm1570, %v1543, %v684
      %v1577 = vsel %vm1570, %v1544, %v686
      %v1578 = vsel %vm1570, %v1545, %v688
      %v1579 = vsel %vm1570, %v1546, %v690
      %v1580 = vsel %vm1570, %v1547, %v692
      %v1581 = vsel %vm1570, %v1548, %v694
      %v1582 = vsel %vm1570, %v1549, %v696
      %v1583 = vsel %vm1570, %v1550, %v698
      %v1584 = vsel %vm1570, %v1551, %v700
      %v1585 = vsel %vm1570, %v1552, %v702
      %v1586 = vsel %vm1570, %v1553, %v704
      %v1587 = vsel %vm1570, %v1554, %v706
      %v1588 = vsel %vm1570, %v1555, %v708
      %v1589 = vsel %vm1570, %v1556, %v710
      %v1590 = vsel %vm1570, %v1557, %v712
      %v1591 = vsel %vm1570, %v1558, %v714
      %v1592 = vsel %vm1570, %v1559, %v716
      %v1593 = vsel %vm1570, %v1560, %v718
      %v1594 = vsel %vm1570, %v1561, %v720
      %v1595 = vsel %vm1570, %v1562, %v722
      %v1596 = vsel %vm1570, %v1563, %v724
      %v1597 = vsel %vm1570, %v1564, %v726
      %v1598 = vsel %vm1570, %v1565, %v728
      %v1599 = vsel %vm1570, %v1566, %v730
      %v1600 = vsel %vm1570, %v1567, %v732
      %v1601 = vsel %vm1570, %v1568, %v734
      %v1602 = vsel %vm1570, %v1569, %v736
      %vm1603 = vcmask 72704
      %v1604 = vsel %vm1603, %v1571, %v802
      %v1605 = vsel %vm1603, %v1572, %v804
      %v1606 = vsel %vm1603, %v1573, %v806
      %v1607 = vsel %vm1603, %v1574, %v808
      %v1608 = vsel %vm1603, %v1575, %v810
      %v1609 = vsel %vm1603, %v1576, %v812
      %v1610 = vsel %vm1603, %v1577, %v814
      %v1611 = vsel %vm1603, %v1578, %v816
      %v1612 = vsel %vm1603, %v1579, %v818
      %v1613 = vsel %vm1603, %v1580, %v820
      %v1614 = vsel %vm1603, %v1581, %v822
      %v1615 = vsel %vm1603, %v1582, %v824
      %v1616 = vsel %vm1603, %v1583, %v826
      %v1617 = vsel %vm1603, %v1584, %v828
      %v1618 = vsel %vm1603, %v1585, %v830
      %v1619 = vsel %vm1603, %v1586, %v832
      %v1620 = vsel %vm1603, %v1587, %v834
      %v1621 = vsel %vm1603, %v1588, %v836
      %v1622 = vsel %vm1603, %v1589, %v838
      %v1623 = vsel %vm1603, %v1590, %v840
      %v1624 = vsel %vm1603, %v1591, %v842
      %v1625 = vsel %vm1603, %v1592, %v844
      %v1626 = vsel %vm1603, %v1593, %v846
      %v1627 = vsel %vm1603, %v1594, %v848
      %v1628 = vsel %vm1603, %v1595, %v850
      %v1629 = vsel %vm1603, %v1596, %v852
      %v1630 = vsel %vm1603, %v1597, %v854
      %v1631 = vsel %vm1603, %v1598, %v856
      %v1632 = vsel %vm1603, %v1599, %v858
      %v1633 = vsel %vm1603, %v1600, %v860
      %v1634 = vsel %vm1603, %v1601, %v862
      %v1635 = vsel %vm1603, %v1602, %v864
      %vm1636 = vcmask 97280
      %v1637 = vsel %vm1636, %v1604, %v930
      %v1638 = vsel %vm1636, %v1605, %v932
      %v1639 = vsel %vm1636, %v1606, %v934
      %v1640 = vsel %vm1636, %v1607, %v936
      %v1641 = vsel %vm1636, %v1608, %v938
      %v1642 = vsel %vm1636, %v1609, %v940
      %v1643 = vsel %vm1636, %v1610, %v942
      %v1644 = vsel %vm1636, %v1611, %v944
      %v1645 = vsel %vm1636, %v1612, %v946
      %v1646 = vsel %vm1636, %v1613, %v948
      %v1647 = vsel %vm1636, %v1614, %v950
      %v1648 = vsel %vm1636, %v1615, %v952
      %v1649 = vsel %vm1636, %v1616, %v954
      %v1650 = vsel %vm1636, %v1617, %v956
      %v1651 = vsel %vm1636, %v1618, %v958
      %v1652 = vsel %vm1636, %v1619, %v960
      %v1653 = vsel %vm1636, %v1620, %v962
      %v1654 = vsel %vm1636, %v1621, %v964
      %v1655 = vsel %vm1636, %v1622, %v966
      %v1656 = vsel %vm1636, %v1623, %v968
      %v1657 = vsel %vm1636, %v1624, %v970
      %v1658 = vsel %vm1636, %v1625, %v972
      %v1659 = vsel %vm1636, %v1626, %v974
      %v1660 = vsel %vm1636, %v1627, %v976
      %v1661 = vsel %vm1636, %v1628, %v978
      %v1662 = vsel %vm1636, %v1629, %v980
      %v1663 = vsel %vm1636, %v1630, %v982
      %v1664 = vsel %vm1636, %v1631, %v984
      %v1665 = vsel %vm1636, %v1632, %v986
      %v1666 = vsel %vm1636, %v1633, %v988
      %v1667 = vsel %vm1636, %v1634, %v990
      %v1668 = vsel %vm1636, %v1635, %v992
      %vm1669 = vcmask 121856
      %v1670 = vsel %vm1669, %v1637, %v1058
      %v1671 = vsel %vm1669, %v1638, %v1060
      %v1672 = vsel %vm1669, %v1639, %v1062
      %v1673 = vsel %vm1669, %v1640, %v1064
      %v1674 = vsel %vm1669, %v1641, %v1066
      %v1675 = vsel %vm1669, %v1642, %v1068
      %v1676 = vsel %vm1669, %v1643, %v1070
      %v1677 = vsel %vm1669, %v1644, %v1072
      %v1678 = vsel %vm1669, %v1645, %v1074
      %v1679 = vsel %vm1669, %v1646, %v1076
      %v1680 = vsel %vm1669, %v1647, %v1078
      %v1681 = vsel %vm1669, %v1648, %v1080
      %v1682 = vsel %vm1669, %v1649, %v1082
      %v1683 = vsel %vm1669, %v1650, %v1084
      %v1684 = vsel %vm1669, %v1651, %v1086
      %v1685 = vsel %vm1669, %v1652, %v1088
      %v1686 = vsel %vm1669, %v1653, %v1090
      %v1687 = vsel %vm1669, %v1654, %v1092
      %v1688 = vsel %vm1669, %v1655, %v1094
      %v1689 = vsel %vm1669, %v1656, %v1096
      %v1690 = vsel %vm1669, %v1657, %v1098
      %v1691 = vsel %vm1669, %v1658, %v1100
      %v1692 = vsel %vm1669, %v1659, %v1102
      %v1693 = vsel %vm1669, %v1660, %v1104
      %v1694 = vsel %vm1669, %v1661, %v1106
      %v1695 = vsel %vm1669, %v1662, %v1108
      %v1696 = vsel %vm1669, %v1663, %v1110
      %v1697 = vsel %vm1669, %v1664, %v1112
      %v1698 = vsel %vm1669, %v1665, %v1114
      %v1699 = vsel %vm1669, %v1666, %v1116
      %v1700 = vsel %vm1669, %v1667, %v1118
      %v1701 = vsel %vm1669, %v1668, %v1120
      %vm1702 = vcmask 146432
      %v1703 = vsel %vm1702, %v1670, %v1186
      %v1704 = vsel %vm1702, %v1671, %v1188
      %v1705 = vsel %vm1702, %v1672, %v1190
      %v1706 = vsel %vm1702, %v1673, %v1192
      %v1707 = vsel %vm1702, %v1674, %v1194
      %v1708 = vsel %vm1702, %v1675, %v1196
      %v1709 = vsel %vm1702, %v1676, %v1198
      %v1710 = vsel %vm1702, %v1677, %v1200
      %v1711 = vsel %vm1702, %v1678, %v1202
      %v1712 = vsel %vm1702, %v1679, %v1204
      %v1713 = vsel %vm1702, %v1680, %v1206
      %v1714 = vsel %vm1702, %v1681, %v1208
      %v1715 = vsel %vm1702, %v1682, %v1210
      %v1716 = vsel %vm1702, %v1683, %v1212
      %v1717 = vsel %vm1702, %v1684, %v1214
      %v1718 = vsel %vm1702, %v1685, %v1216
      %v1719 = vsel %vm1702, %v1686, %v1218
      %v1720 = vsel %vm1702, %v1687, %v1220
      %v1721 = vsel %vm1702, %v1688, %v1222
      %v1722 = vsel %vm1702, %v1689, %v1224
      %v1723 = vsel %vm1702, %v1690, %v1226
      %v1724 = vsel %vm1702, %v1691, %v1228
      %v1725 = vsel %vm1702, %v1692, %v1230
      %v1726 = vsel %vm1702, %v1693, %v1232
      %v1727 = vsel %vm1702, %v1694, %v1234
      %v1728 = vsel %vm1702, %v1695, %v1236
      %v1729 = vsel %vm1702, %v1696, %v1238
      %v1730 = vsel %vm1702, %v1697, %v1240
      %v1731 = vsel %vm1702, %v1698, %v1242
      %v1732 = vsel %vm1702, %v1699, %v1244
      %v1733 = vsel %vm1702, %v1700, %v1246
      %v1734 = vsel %vm1702, %v1701, %v1248
      %vm1735 = vcmask 171008
      %v1736 = vsel %vm1735, %v1703, %v1314
      %v1737 = vsel %vm1735, %v1704, %v1316
      %v1738 = vsel %vm1735, %v1705, %v1318
      %v1739 = vsel %vm1735, %v1706, %v1320
      %v1740 = vsel %vm1735, %v1707, %v1322
      %v1741 = vsel %vm1735, %v1708, %v1324
      %v1742 = vsel %vm1735, %v1709, %v1326
      %v1743 = vsel %vm1735, %v1710, %v1328
      %v1744 = vsel %vm1735, %v1711, %v1330
      %v1745 = vsel %vm1735, %v1712, %v1332
      %v1746 = vsel %vm1735, %v1713, %v1334
      %v1747 = vsel %vm1735, %v1714, %v1336
      %v1748 = vsel %vm1735, %v1715, %v1338
      %v1749 = vsel %vm1735, %v1716, %v1340
      %v1750 = vsel %vm1735, %v1717, %v1342
      %v1751 = vsel %vm1735, %v1718, %v1344
      %v1752 = vsel %vm1735, %v1719, %v1346
      %v1753 = vsel %vm1735, %v1720, %v1348
      %v1754 = vsel %vm1735, %v1721, %v1350
      %v1755 = vsel %vm1735, %v1722, %v1352
      %v1756 = vsel %vm1735, %v1723, %v1354
      %v1757 = vsel %vm1735, %v1724, %v1356
      %v1758 = vsel %vm1735, %v1725, %v1358
      %v1759 = vsel %vm1735, %v1726, %v1360
      %v1760 = vsel %vm1735, %v1727, %v1362
      %v1761 = vsel %vm1735, %v1728, %v1364
      %v1762 = vsel %vm1735, %v1729, %v1366
      %v1763 = vsel %vm1735, %v1730, %v1368
      %v1764 = vsel %vm1735, %v1731, %v1370
      %v1765 = vsel %vm1735, %v1732, %v1372
      %v1766 = vsel %vm1735, %v1733, %v1374
      %v1767 = vsel %vm1735, %v1734, %v1376
      %vm1768 = vcmask 195584
      %v1769 = vsel %vm1768, %v1736, %v1442
      %v1770 = vsel %vm1768, %v1737, %v1444
      %v1771 = vsel %vm1768, %v1738, %v1446
      %v1772 = vsel %vm1768, %v1739, %v1448
      %v1773 = vsel %vm1768, %v1740, %v1450
      %v1774 = vsel %vm1768, %v1741, %v1452
      %v1775 = vsel %vm1768, %v1742, %v1454
      %v1776 = vsel %vm1768, %v1743, %v1456
      %v1777 = vsel %vm1768, %v1744, %v1458
      %v1778 = vsel %vm1768, %v1745, %v1460
      %v1779 = vsel %vm1768, %v1746, %v1462
      %v1780 = vsel %vm1768, %v1747, %v1464
      %v1781 = vsel %vm1768, %v1748, %v1466
      %v1782 = vsel %vm1768, %v1749, %v1468
      %v1783 = vsel %vm1768, %v1750, %v1470
      %v1784 = vsel %vm1768, %v1751, %v1472
      %v1785 = vsel %vm1768, %v1752, %v1474
      %v1786 = vsel %vm1768, %v1753, %v1476
      %v1787 = vsel %vm1768, %v1754, %v1478
      %v1788 = vsel %vm1768, %v1755, %v1480
      %v1789 = vsel %vm1768, %v1756, %v1482
      %v1790 = vsel %vm1768, %v1757, %v1484
      %v1791 = vsel %vm1768, %v1758, %v1486
      %v1792 = vsel %vm1768, %v1759, %v1488
      %v1793 = vsel %vm1768, %v1760, %v1490
      %v1794 = vsel %vm1768, %v1761, %v1492
      %v1795 = vsel %vm1768, %v1762, %v1494
      %v1796 = vsel %vm1768, %v1763, %v1496
      %v1797 = vsel %vm1768, %v1764, %v1498
      %v1798 = vsel %vm1768, %v1765, %v1500
      %v1799 = vsel %vm1768, %v1766, %v1502
      %v1800 = vsel %vm1768, %v1767, %v1504
      %v1801 = vpack.c.bf16 %v1770, %v1769
      %v1802 = vpack.c.bf16 %v1772, %v1771
      %v1803 = vpack.c.bf16 %v1774, %v1773
      %v1804 = vpack.c.bf16 %v1776, %v1775
      %v1805 = vpack.c.bf16 %v1778, %v1777
      %v1806 = vpack.c.bf16 %v1780, %v1779
      %v1807 = vpack.c.bf16 %v1782, %v1781
      %v1808 = vpack.c.bf16 %v1784, %v1783
      %v1809 = vpack.c.bf16 %v1786, %v1785
      %v1810 = vpack.c.bf16 %v1788, %v1787
      %v1811 = vpack.c.bf16 %v1790, %v1789
      %v1812 = vpack.c.bf16 %v1792, %v1791
      %v1813 = vpack.c.bf16 %v1794, %v1793
      %v1814 = vpack.c.bf16 %v1796, %v1795
      %v1815 = vpack.c.bf16 %v1798, %v1797
      %v1816 = vpack.c.bf16 %v1800, %v1799
      %v1817 = vld [vmem:[%s210] sm:$0xf]
      %v1818 = vld [vmem:[%s210 + $0x4] sm:$0xf]
      %v1819 = vld [vmem:[%s210 + $0x8] sm:$0xf]
      %v1820 = vld [vmem:[%s210 + $0xc] sm:$0x3]
      %v1821 = vld [vmem:[%s213] sm:$0x1]
      %v1823 = vperm.slane %v1821, 0
      %v1829 = vunpack.c.l.b16 %v1817
      %v1830 = vunpack.c.l.b16 %v1818
      %v1831 = vunpack.c.l.b16 %v1819
      %v1832 = vunpack.c.l.b16 %v1820
      %v1833 = vpack.c.b16 %v1830, %v1829
      %v1834 = vpack.c.b16 %v1832, %v1831
      %vm1836 = vcmask 220160
      %v1838 = vsel %vm1836, %v1801, 0
      %v1841 = vsel %vm1836, %v1802, 0
      %v1844 = vsel %vm1836, %v1803, 0
      %v1847 = vsel %vm1836, %v1804, 0
      %v1850 = vsel %vm1836, %v1805, 0
      %v1853 = vsel %vm1836, %v1806, 0
      %v1856 = vsel %vm1836, %v1807, 0
      %v1859 = vsel %vm1836, %v1808, 0
      %v1862 = vsel %vm1836, %v1809, 0
      %v1865 = vsel %vm1836, %v1810, 0
      %v1868 = vsel %vm1836, %v1811, 0
      %v1871 = vsel %vm1836, %v1812, 0
      %v1874 = vsel %vm1836, %v1813, 0
      %v1877 = vsel %vm1836, %v1814, 0
      %v1880 = vsel %vm1836, %v1815, 0
      %v1883 = vsel %vm1836, %v1816, 0
      %vm1885 = vcmask 1044480
      %vm1886 = vcmask 1045504
      %v1887 = vsel %vm1885, 4294967295, 65535
      %v1888 = vsel %vm1886, %v1887, 0
      %v1890 = vand.u32 %v1834, %v1888
      %1892 = vmatpush.bf16.msra.mxu0 0
      %1893 = vmatpush.bf16.msra.mxu0 0
      %1894 = vmatpush.bf16.msra.mxu0 0
      %1895 = vmatpush.bf16.msra.mxu0 0
      %1896 = vmatpush.bf16.msra.mxu0 0
      %1897 = vmatpush.bf16.msra.mxu0 0
      %1898 = vmatpush.bf16.msra.mxu0 %v1890
      %1899 = vmatpush.bf16.msra.mxu0 %v1833
      %1900 = vmatmul.bf16.gmra.mxu0 %v1838
      %v1901 = vpop.f32.mrf.mxu0
      %v1902 = vadd.f32 %v1823, %v1901
      %v1903 = vpop.f32.mrf.mxu0
      %v1904 = vadd.f32 %v1823, %v1903
      %1905 = vmatmul.bf16.gmra.mxu0 %v1841
      %v1906 = vpop.f32.mrf.mxu0
      %v1907 = vadd.f32 %v1823, %v1906
      %v1908 = vpop.f32.mrf.mxu0
      %v1909 = vadd.f32 %v1823, %v1908
      %1910 = vmatmul.bf16.gmra.mxu0 %v1844
      %v1911 = vpop.f32.mrf.mxu0
      %v1912 = vadd.f32 %v1823, %v1911
      %v1913 = vpop.f32.mrf.mxu0
      %v1914 = vadd.f32 %v1823, %v1913
      %1915 = vmatmul.bf16.gmra.mxu0 %v1847
      %v1916 = vpop.f32.mrf.mxu0
      %v1917 = vadd.f32 %v1823, %v1916
      %v1918 = vpop.f32.mrf.mxu0
      %v1919 = vadd.f32 %v1823, %v1918
      %1920 = vmatmul.bf16.gmra.mxu0 %v1850
      %v1921 = vpop.f32.mrf.mxu0
      %v1922 = vadd.f32 %v1823, %v1921
      %v1923 = vpop.f32.mrf.mxu0
      %v1924 = vadd.f32 %v1823, %v1923
      %1925 = vmatmul.bf16.gmra.mxu0 %v1853
      %v1926 = vpop.f32.mrf.mxu0
      %v1927 = vadd.f32 %v1823, %v1926
      %v1928 = vpop.f32.mrf.mxu0
      %v1929 = vadd.f32 %v1823, %v1928
      %1930 = vmatmul.bf16.gmra.mxu0 %v1856
      %v1931 = vpop.f32.mrf.mxu0
      %v1932 = vadd.f32 %v1823, %v1931
      %v1933 = vpop.f32.mrf.mxu0
      %v1934 = vadd.f32 %v1823, %v1933
      %1935 = vmatmul.bf16.gmra.mxu0 %v1859
      %v1936 = vpop.f32.mrf.mxu0
      %v1937 = vadd.f32 %v1823, %v1936
      %v1938 = vpop.f32.mrf.mxu0
      %v1939 = vadd.f32 %v1823, %v1938
      %1940 = vmatmul.bf16.gmra.mxu0 %v1862
      %v1941 = vpop.f32.mrf.mxu0
      %v1942 = vadd.f32 %v1823, %v1941
      %v1943 = vpop.f32.mrf.mxu0
      %v1944 = vadd.f32 %v1823, %v1943
      %1945 = vmatmul.bf16.gmra.mxu0 %v1865
      %v1946 = vpop.f32.mrf.mxu0
      %v1947 = vadd.f32 %v1823, %v1946
      %v1948 = vpop.f32.mrf.mxu0
      %v1949 = vadd.f32 %v1823, %v1948
      %1950 = vmatmul.bf16.gmra.mxu0 %v1868
      %v1951 = vpop.f32.mrf.mxu0
      %v1952 = vadd.f32 %v1823, %v1951
      %v1953 = vpop.f32.mrf.mxu0
      %v1954 = vadd.f32 %v1823, %v1953
      %1955 = vmatmul.bf16.gmra.mxu0 %v1871
      %v1956 = vpop.f32.mrf.mxu0
      %v1957 = vadd.f32 %v1823, %v1956
      %v1958 = vpop.f32.mrf.mxu0
      %v1959 = vadd.f32 %v1823, %v1958
      %1960 = vmatmul.bf16.gmra.mxu0 %v1874
      %v1961 = vpop.f32.mrf.mxu0
      %v1962 = vadd.f32 %v1823, %v1961
      %v1963 = vpop.f32.mrf.mxu0
      %v1964 = vadd.f32 %v1823, %v1963
      %1965 = vmatmul.bf16.gmra.mxu0 %v1877
      %v1966 = vpop.f32.mrf.mxu0
      %v1967 = vadd.f32 %v1823, %v1966
      %v1968 = vpop.f32.mrf.mxu0
      %v1969 = vadd.f32 %v1823, %v1968
      %1970 = vmatmul.bf16.gmra.mxu0 %v1880
      %v1971 = vpop.f32.mrf.mxu0
      %v1972 = vadd.f32 %v1823, %v1971
      %v1973 = vpop.f32.mrf.mxu0
      %v1974 = vadd.f32 %v1823, %v1973
      %1975 = vmatmul.bf16.gmra.mxu0 %v1883
      %v1976 = vpop.f32.mrf.mxu0
      %v1977 = vadd.f32 %v1823, %v1976
      %v1978 = vpop.f32.mrf.mxu0
      %v1979 = vadd.f32 %v1823, %v1978
      %1980 = vdwg.mxu0
      %v1981 = vmax.f32 %v1902, 0.0
      %v1982 = vmax.f32 %v1904, 0.0
      %v1983 = vmax.f32 %v1907, 0.0
      %v1984 = vmax.f32 %v1909, 0.0
      %v1985 = vmax.f32 %v1912, 0.0
      %v1986 = vmax.f32 %v1914, 0.0
      %v1987 = vmax.f32 %v1917, 0.0
      %v1988 = vmax.f32 %v1919, 0.0
      %v1989 = vmax.f32 %v1922, 0.0
      %v1990 = vmax.f32 %v1924, 0.0
      %v1991 = vmax.f32 %v1927, 0.0
      %v1992 = vmax.f32 %v1929, 0.0
      %v1993 = vmax.f32 %v1932, 0.0
      %v1994 = vmax.f32 %v1934, 0.0
      %v1995 = vmax.f32 %v1937, 0.0
      %v1996 = vmax.f32 %v1939, 0.0
      %v1997 = vmax.f32 %v1942, 0.0
      %v1998 = vmax.f32 %v1944, 0.0
      %v1999 = vmax.f32 %v1947, 0.0
      %v2000 = vmax.f32 %v1949, 0.0
      %v2001 = vmax.f32 %v1952, 0.0
      %v2002 = vmax.f32 %v1954, 0.0
      %v2003 = vmax.f32 %v1957, 0.0
      %v2004 = vmax.f32 %v1959, 0.0
      %v2005 = vmax.f32 %v1962, 0.0
      %v2006 = vmax.f32 %v1964, 0.0
      %v2007 = vmax.f32 %v1967, 0.0
      %v2008 = vmax.f32 %v1969, 0.0
      %v2009 = vmax.f32 %v1972, 0.0
      %v2010 = vmax.f32 %v1974, 0.0
      %v2011 = vmax.f32 %v1977, 0.0
      %v2012 = vmax.f32 %v1979, 0.0
      %v2045 = vrot.slane %v1981, 2
      %v2046 = vrot.slane %v1981, 4
      %v2047 = vrot.slane %v1981, 6
      %v2048 = vrot.slane %v1982, 2
      %v2049 = vrot.slane %v1982, 4
      %v2050 = vrot.slane %v1982, 6
      %v2051 = vrot.slane %v1983, 2
      %v2052 = vrot.slane %v1983, 4
      %v2053 = vrot.slane %v1983, 6
      %v2054 = vrot.slane %v1984, 2
      %v2055 = vrot.slane %v1984, 4
      %v2056 = vrot.slane %v1984, 6
      %v2057 = vrot.slane %v1985, 2
      %v2058 = vrot.slane %v1985, 4
      %v2059 = vrot.slane %v1985, 6
      %v2060 = vrot.slane %v1986, 2
      %v2061 = vrot.slane %v1986, 4
      %v2062 = vrot.slane %v1986, 6
      %v2063 = vrot.slane %v1987, 2
      %v2064 = vrot.slane %v1987, 4
      %v2065 = vrot.slane %v1987, 6
      %v2066 = vrot.slane %v1988, 2
      %v2067 = vrot.slane %v1988, 4
      %v2068 = vrot.slane %v1988, 6
      %v2069 = vrot.slane %v1989, 2
      %v2070 = vrot.slane %v1989, 4
      %v2071 = vrot.slane %v1989, 6
      %v2072 = vrot.slane %v1990, 2
      %v2073 = vrot.slane %v1990, 4
      %v2074 = vrot.slane %v1990, 6
      %v2075 = vrot.slane %v1991, 2
      %v2076 = vrot.slane %v1991, 4
      %v2077 = vrot.slane %v1991, 6
      %v2078 = vrot.slane %v1992, 2
      %v2079 = vrot.slane %v1992, 4
      %v2080 = vrot.slane %v1992, 6
      %v2081 = vrot.slane %v1993, 2
      %v2082 = vrot.slane %v1993, 4
      %v2083 = vrot.slane %v1993, 6
      %v2084 = vrot.slane %v1994, 2
      %v2085 = vrot.slane %v1994, 4
      %v2086 = vrot.slane %v1994, 6
      %v2087 = vrot.slane %v1995, 2
      %v2088 = vrot.slane %v1995, 4
      %v2089 = vrot.slane %v1995, 6
      %v2090 = vrot.slane %v1996, 2
      %v2091 = vrot.slane %v1996, 4
      %v2092 = vrot.slane %v1996, 6
      %v2093 = vrot.slane %v1997, 2
      %v2094 = vrot.slane %v1997, 4
      %v2095 = vrot.slane %v1997, 6
      %v2096 = vrot.slane %v1998, 2
      %v2097 = vrot.slane %v1998, 4
      %v2098 = vrot.slane %v1998, 6
      %v2099 = vrot.slane %v1999, 2
      %v2100 = vrot.slane %v1999, 4
      %v2101 = vrot.slane %v1999, 6
      %v2102 = vrot.slane %v2000, 2
      %v2103 = vrot.slane %v2000, 4
      %v2104 = vrot.slane %v2000, 6
      %v2105 = vrot.slane %v2001, 2
      %v2106 = vrot.slane %v2001, 4
      %v2107 = vrot.slane %v2001, 6
      %v2108 = vrot.slane %v2002, 2
      %v2109 = vrot.slane %v2002, 4
      %v2110 = vrot.slane %v2002, 6
      %v2111 = vrot.slane %v2003, 2
      %v2112 = vrot.slane %v2003, 4
      %v2113 = vrot.slane %v2003, 6
      %v2114 = vrot.slane %v2004, 2
      %v2115 = vrot.slane %v2004, 4
      %v2116 = vrot.slane %v2004, 6
      %v2117 = vrot.slane %v2005, 2
      %v2118 = vrot.slane %v2005, 4
      %v2119 = vrot.slane %v2005, 6
      %v2120 = vrot.slane %v2006, 2
      %v2121 = vrot.slane %v2006, 4
      %v2122 = vrot.slane %v2006, 6
      %v2123 = vrot.slane %v2007, 2
      %v2124 = vrot.slane %v2007, 4
      %v2125 = vrot.slane %v2007, 6
      %v2126 = vrot.slane %v2008, 2
      %v2127 = vrot.slane %v2008, 4
      %v2128 = vrot.slane %v2008, 6
      %v2129 = vrot.slane %v2009, 2
      %v2130 = vrot.slane %v2009, 4
      %v2131 = vrot.slane %v2009, 6
      %v2132 = vrot.slane %v2010, 2
      %v2133 = vrot.slane %v2010, 4
      %v2134 = vrot.slane %v2010, 6
      %v2135 = vrot.slane %v2011, 2
      %v2136 = vrot.slane %v2011, 4
      %v2137 = vrot.slane %v2011, 6
      %v2138 = vrot.slane %v2012, 2
      %v2139 = vrot.slane %v2012, 4
      %v2140 = vrot.slane %v2012, 6
      %v2237 = vmax.f32 %v1981, %v1983
      %v2238 = vmax.f32 %v2045, %v2051
      %v2239 = vmax.f32 %v2046, %v2052
      %v2240 = vmax.f32 %v2047, %v2053
      %v2241 = vmax.f32 %v1982, %v1984
      %v2242 = vmax.f32 %v2048, %v2054
      %v2243 = vmax.f32 %v2049, %v2055
      %v2244 = vmax.f32 %v2050, %v2056
      %v2245 = vmax.f32 %v1985, %v1987
      %v2246 = vmax.f32 %v2057, %v2063
      %v2247 = vmax.f32 %v2058, %v2064
      %v2248 = vmax.f32 %v2059, %v2065
      %v2249 = vmax.f32 %v1986, %v1988
      %v2250 = vmax.f32 %v2060, %v2066
      %v2251 = vmax.f32 %v2061, %v2067
      %v2252 = vmax.f32 %v2062, %v2068
      %v2253 = vmax.f32 %v1989, %v1991
      %v2254 = vmax.f32 %v2069, %v2075
      %v2255 = vmax.f32 %v2070, %v2076
      %v2256 = vmax.f32 %v2071, %v2077
      %v2257 = vmax.f32 %v1990, %v1992
      %v2258 = vmax.f32 %v2072, %v2078
      %v2259 = vmax.f32 %v2073, %v2079
      %v2260 = vmax.f32 %v2074, %v2080
      %v2261 = vmax.f32 %v1993, %v1995
      %v2262 = vmax.f32 %v2081, %v2087
      %v2263 = vmax.f32 %v2082, %v2088
      %v2264 = vmax.f32 %v2083, %v2089
      %v2265 = vmax.f32 %v1994, %v1996
      %v2266 = vmax.f32 %v2084, %v2090
      %v2267 = vmax.f32 %v2085, %v2091
      %v2268 = vmax.f32 %v2086, %v2092
      %v2269 = vmax.f32 %v1997, %v1999
      %v2270 = vmax.f32 %v2093, %v2099
      %v2271 = vmax.f32 %v2094, %v2100
      %v2272 = vmax.f32 %v2095, %v2101
      %v2273 = vmax.f32 %v1998, %v2000
      %v2274 = vmax.f32 %v2096, %v2102
      %v2275 = vmax.f32 %v2097, %v2103
      %v2276 = vmax.f32 %v2098, %v2104
      %v2277 = vmax.f32 %v2001, %v2003
      %v2278 = vmax.f32 %v2105, %v2111
      %v2279 = vmax.f32 %v2106, %v2112
      %v2280 = vmax.f32 %v2107, %v2113
      %v2281 = vmax.f32 %v2002, %v2004
      %v2282 = vmax.f32 %v2108, %v2114
      %v2283 = vmax.f32 %v2109, %v2115
      %v2284 = vmax.f32 %v2110, %v2116
      %v2285 = vmax.f32 %v2005, %v2007
      %v2286 = vmax.f32 %v2117, %v2123
      %v2287 = vmax.f32 %v2118, %v2124
      %v2288 = vmax.f32 %v2119, %v2125
      %v2289 = vmax.f32 %v2006, %v2008
      %v2290 = vmax.f32 %v2120, %v2126
      %v2291 = vmax.f32 %v2121, %v2127
      %v2292 = vmax.f32 %v2122, %v2128
      %v2293 = vmax.f32 %v2009, %v2011
      %v2294 = vmax.f32 %v2129, %v2135
      %v2295 = vmax.f32 %v2130, %v2136
      %v2296 = vmax.f32 %v2131, %v2137
      %v2297 = vmax.f32 %v2010, %v2012
      %v2298 = vmax.f32 %v2132, %v2138
      %v2299 = vmax.f32 %v2133, %v2139
      %v2300 = vmax.f32 %v2134, %v2140
      %vm2301 = vcmask 123904
      %v2302 = vsel %vm2301, %v2237, -inf
      %v2303 = vrot.slane %v2302, 4
      %v2304 = vmax.f32 %v2302, %v2303
      %v2305 = vrot.slane %v2304, 2
      %v2306 = vmax.f32 %v2304, %v2305
      %v2307 = vrot.slane %v2306, 1
      %v2308 = vmax.f32 %v2306, %v2307
      %v2309 = vsel %vm2301, %v2238, -inf
      %v2310 = vrot.slane %v2309, 4
      %v2311 = vmax.f32 %v2309, %v2310
      %v2312 = vrot.slane %v2311, 2
      %v2313 = vmax.f32 %v2311, %v2312
      %v2314 = vrot.slane %v2313, 1
      %v2315 = vmax.f32 %v2313, %v2314
      %v2316 = vsel %vm2301, %v2239, -inf
      %v2317 = vrot.slane %v2316, 4
      %v2318 = vmax.f32 %v2316, %v2317
      %v2319 = vrot.slane %v2318, 2
      %v2320 = vmax.f32 %v2318, %v2319
      %v2321 = vrot.slane %v2320, 1
      %v2322 = vmax.f32 %v2320, %v2321
      %v2323 = vsel %vm2301, %v2240, -inf
      %v2324 = vrot.slane %v2323, 4
      %v2325 = vmax.f32 %v2323, %v2324
      %v2326 = vrot.slane %v2325, 2
      %v2327 = vmax.f32 %v2325, %v2326
      %v2328 = vrot.slane %v2327, 1
      %v2329 = vmax.f32 %v2327, %v2328
      %v2330 = vsel %vm2301, %v2241, -inf
      %v2331 = vrot.slane %v2330, 4
      %v2332 = vmax.f32 %v2330, %v2331
      %v2333 = vrot.slane %v2332, 2
      %v2334 = vmax.f32 %v2332, %v2333
      %v2335 = vrot.slane %v2334, 1
      %v2336 = vmax.f32 %v2334, %v2335
      %v2337 = vsel %vm2301, %v2242, -inf
      %v2338 = vrot.slane %v2337, 4
      %v2339 = vmax.f32 %v2337, %v2338
      %v2340 = vrot.slane %v2339, 2
      %v2341 = vmax.f32 %v2339, %v2340
      %v2342 = vrot.slane %v2341, 1
      %v2343 = vmax.f32 %v2341, %v2342
      %v2344 = vsel %vm2301, %v2243, -inf
      %v2345 = vrot.slane %v2344, 4
      %v2346 = vmax.f32 %v2344, %v2345
      %v2347 = vrot.slane %v2346, 2
      %v2348 = vmax.f32 %v2346, %v2347
      %v2349 = vrot.slane %v2348, 1
      %v2350 = vmax.f32 %v2348, %v2349
      %v2351 = vsel %vm2301, %v2244, -inf
      %v2352 = vrot.slane %v2351, 4
      %v2353 = vmax.f32 %v2351, %v2352
      %v2354 = vrot.slane %v2353, 2
      %v2355 = vmax.f32 %v2353, %v2354
      %v2356 = vrot.slane %v2355, 1
      %v2357 = vmax.f32 %v2355, %v2356
      %v2358 = vsel %vm2301, %v2245, -inf
      %v2359 = vrot.slane %v2358, 4
      %v2360 = vmax.f32 %v2358, %v2359
      %v2361 = vrot.slane %v2360, 2
      %v2362 = vmax.f32 %v2360, %v2361
      %v2363 = vrot.slane %v2362, 1
      %v2364 = vmax.f32 %v2362, %v2363
      %v2365 = vsel %vm2301, %v2246, -inf
      %v2366 = vrot.slane %v2365, 4
      %v2367 = vmax.f32 %v2365, %v2366
      %v2368 = vrot.slane %v2367, 2
      %v2369 = vmax.f32 %v2367, %v2368
      %v2370 = vrot.slane %v2369, 1
      %v2371 = vmax.f32 %v2369, %v2370
      %v2372 = vsel %vm2301, %v2247, -inf
      %v2373 = vrot.slane %v2372, 4
      %v2374 = vmax.f32 %v2372, %v2373
      %v2375 = vrot.slane %v2374, 2
      %v2376 = vmax.f32 %v2374, %v2375
      %v2377 = vrot.slane %v2376, 1
      %v2378 = vmax.f32 %v2376, %v2377
      %v2379 = vsel %vm2301, %v2248, -inf
      %v2380 = vrot.slane %v2379, 4
      %v2381 = vmax.f32 %v2379, %v2380
      %v2382 = vrot.slane %v2381, 2
      %v2383 = vmax.f32 %v2381, %v2382
      %v2384 = vrot.slane %v2383, 1
      %v2385 = vmax.f32 %v2383, %v2384
      %v2386 = vsel %vm2301, %v2249, -inf
      %v2387 = vrot.slane %v2386, 4
      %v2388 = vmax.f32 %v2386, %v2387
      %v2389 = vrot.slane %v2388, 2
      %v2390 = vmax.f32 %v2388, %v2389
      %v2391 = vrot.slane %v2390, 1
      %v2392 = vmax.f32 %v2390, %v2391
      %v2393 = vsel %vm2301, %v2250, -inf
      %v2394 = vrot.slane %v2393, 4
      %v2395 = vmax.f32 %v2393, %v2394
      %v2396 = vrot.slane %v2395, 2
      %v2397 = vmax.f32 %v2395, %v2396
      %v2398 = vrot.slane %v2397, 1
      %v2399 = vmax.f32 %v2397, %v2398
      %v2400 = vsel %vm2301, %v2251, -inf
      %v2401 = vrot.slane %v2400, 4
      %v2402 = vmax.f32 %v2400, %v2401
      %v2403 = vrot.slane %v2402, 2
      %v2404 = vmax.f32 %v2402, %v2403
      %v2405 = vrot.slane %v2404, 1
      %v2406 = vmax.f32 %v2404, %v2405
      %v2407 = vsel %vm2301, %v2252, -inf
      %v2408 = vrot.slane %v2407, 4
      %v2409 = vmax.f32 %v2407, %v2408
      %v2410 = vrot.slane %v2409, 2
      %v2411 = vmax.f32 %v2409, %v2410
      %v2412 = vrot.slane %v2411, 1
      %v2413 = vmax.f32 %v2411, %v2412
      %v2414 = vsel %vm2301, %v2253, -inf
      %v2415 = vrot.slane %v2414, 4
      %v2416 = vmax.f32 %v2414, %v2415
      %v2417 = vrot.slane %v2416, 2
      %v2418 = vmax.f32 %v2416, %v2417
      %v2419 = vrot.slane %v2418, 1
      %v2420 = vmax.f32 %v2418, %v2419
      %v2421 = vsel %vm2301, %v2254, -inf
      %v2422 = vrot.slane %v2421, 4
      %v2423 = vmax.f32 %v2421, %v2422
      %v2424 = vrot.slane %v2423, 2
      %v2425 = vmax.f32 %v2423, %v2424
      %v2426 = vrot.slane %v2425, 1
      %v2427 = vmax.f32 %v2425, %v2426
      %v2428 = vsel %vm2301, %v2255, -inf
      %v2429 = vrot.slane %v2428, 4
      %v2430 = vmax.f32 %v2428, %v2429
      %v2431 = vrot.slane %v2430, 2
      %v2432 = vmax.f32 %v2430, %v2431
      %v2433 = vrot.slane %v2432, 1
      %v2434 = vmax.f32 %v2432, %v2433
      %v2435 = vsel %vm2301, %v2256, -inf
      %v2436 = vrot.slane %v2435, 4
      %v2437 = vmax.f32 %v2435, %v2436
      %v2438 = vrot.slane %v2437, 2
      %v2439 = vmax.f32 %v2437, %v2438
      %v2440 = vrot.slane %v2439, 1
      %v2441 = vmax.f32 %v2439, %v2440
      %v2442 = vsel %vm2301, %v2257, -inf
      %v2443 = vrot.slane %v2442, 4
      %v2444 = vmax.f32 %v2442, %v2443
      %v2445 = vrot.slane %v2444, 2
      %v2446 = vmax.f32 %v2444, %v2445
      %v2447 = vrot.slane %v2446, 1
      %v2448 = vmax.f32 %v2446, %v2447
      %v2449 = vsel %vm2301, %v2258, -inf
      %v2450 = vrot.slane %v2449, 4
      %v2451 = vmax.f32 %v2449, %v2450
      %v2452 = vrot.slane %v2451, 2
      %v2453 = vmax.f32 %v2451, %v2452
      %v2454 = vrot.slane %v2453, 1
      %v2455 = vmax.f32 %v2453, %v2454
      %v2456 = vsel %vm2301, %v2259, -inf
      %v2457 = vrot.slane %v2456, 4
      %v2458 = vmax.f32 %v2456, %v2457
      %v2459 = vrot.slane %v2458, 2
      %v2460 = vmax.f32 %v2458, %v2459
      %v2461 = vrot.slane %v2460, 1
      %v2462 = vmax.f32 %v2460, %v2461
      %v2463 = vsel %vm2301, %v2260, -inf
      %v2464 = vrot.slane %v2463, 4
      %v2465 = vmax.f32 %v2463, %v2464
      %v2466 = vrot.slane %v2465, 2
      %v2467 = vmax.f32 %v2465, %v2466
      %v2468 = vrot.slane %v2467, 1
      %v2469 = vmax.f32 %v2467, %v2468
      %v2470 = vsel %vm2301, %v2261, -inf
      %v2471 = vrot.slane %v2470, 4
      %v2472 = vmax.f32 %v2470, %v2471
      %v2473 = vrot.slane %v2472, 2
      %v2474 = vmax.f32 %v2472, %v2473
      %v2475 = vrot.slane %v2474, 1
      %v2476 = vmax.f32 %v2474, %v2475
      %v2477 = vsel %vm2301, %v2262, -inf
      %v2478 = vrot.slane %v2477, 4
      %v2479 = vmax.f32 %v2477, %v2478
      %v2480 = vrot.slane %v2479, 2
      %v2481 = vmax.f32 %v2479, %v2480
      %v2482 = vrot.slane %v2481, 1
      %v2483 = vmax.f32 %v2481, %v2482
      %v2484 = vsel %vm2301, %v2263, -inf
      %v2485 = vrot.slane %v2484, 4
      %v2486 = vmax.f32 %v2484, %v2485
      %v2487 = vrot.slane %v2486, 2
      %v2488 = vmax.f32 %v2486, %v2487
      %v2489 = vrot.slane %v2488, 1
      %v2490 = vmax.f32 %v2488, %v2489
      %v2491 = vsel %vm2301, %v2264, -inf
      %v2492 = vrot.slane %v2491, 4
      %v2493 = vmax.f32 %v2491, %v2492
      %v2494 = vrot.slane %v2493, 2
      %v2495 = vmax.f32 %v2493, %v2494
      %v2496 = vrot.slane %v2495, 1
      %v2497 = vmax.f32 %v2495, %v2496
      %v2498 = vsel %vm2301, %v2265, -inf
      %v2499 = vrot.slane %v2498, 4
      %v2500 = vmax.f32 %v2498, %v2499
      %v2501 = vrot.slane %v2500, 2
      %v2502 = vmax.f32 %v2500, %v2501
      %v2503 = vrot.slane %v2502, 1
      %v2504 = vmax.f32 %v2502, %v2503
      %v2505 = vsel %vm2301, %v2266, -inf
      %v2506 = vrot.slane %v2505, 4
      %v2507 = vmax.f32 %v2505, %v2506
      %v2508 = vrot.slane %v2507, 2
      %v2509 = vmax.f32 %v2507, %v2508
      %v2510 = vrot.slane %v2509, 1
      %v2511 = vmax.f32 %v2509, %v2510
      %v2512 = vsel %vm2301, %v2267, -inf
      %v2513 = vrot.slane %v2512, 4
      %v2514 = vmax.f32 %v2512, %v2513
      %v2515 = vrot.slane %v2514, 2
      %v2516 = vmax.f32 %v2514, %v2515
      %v2517 = vrot.slane %v2516, 1
      %v2518 = vmax.f32 %v2516, %v2517
      %v2519 = vsel %vm2301, %v2268, -inf
      %v2520 = vrot.slane %v2519, 4
      %v2521 = vmax.f32 %v2519, %v2520
      %v2522 = vrot.slane %v2521, 2
      %v2523 = vmax.f32 %v2521, %v2522
      %v2524 = vrot.slane %v2523, 1
      %v2525 = vmax.f32 %v2523, %v2524
      %v2526 = vsel %vm2301, %v2269, -inf
      %v2527 = vrot.slane %v2526, 4
      %v2528 = vmax.f32 %v2526, %v2527
      %v2529 = vrot.slane %v2528, 2
      %v2530 = vmax.f32 %v2528, %v2529
      %v2531 = vrot.slane %v2530, 1
      %v2532 = vmax.f32 %v2530, %v2531
      %v2533 = vsel %vm2301, %v2270, -inf
      %v2534 = vrot.slane %v2533, 4
      %v2535 = vmax.f32 %v2533, %v2534
      %v2536 = vrot.slane %v2535, 2
      %v2537 = vmax.f32 %v2535, %v2536
      %v2538 = vrot.slane %v2537, 1
      %v2539 = vmax.f32 %v2537, %v2538
      %v2540 = vsel %vm2301, %v2271, -inf
      %v2541 = vrot.slane %v2540, 4
      %v2542 = vmax.f32 %v2540, %v2541
      %v2543 = vrot.slane %v2542, 2
      %v2544 = vmax.f32 %v2542, %v2543
      %v2545 = vrot.slane %v2544, 1
      %v2546 = vmax.f32 %v2544, %v2545
      %v2547 = vsel %vm2301, %v2272, -inf
      %v2548 = vrot.slane %v2547, 4
      %v2549 = vmax.f32 %v2547, %v2548
      %v2550 = vrot.slane %v2549, 2
      %v2551 = vmax.f32 %v2549, %v2550
      %v2552 = vrot.slane %v2551, 1
      %v2553 = vmax.f32 %v2551, %v2552
      %v2554 = vsel %vm2301, %v2273, -inf
      %v2555 = vrot.slane %v2554, 4
      %v2556 = vmax.f32 %v2554, %v2555
      %v2557 = vrot.slane %v2556, 2
      %v2558 = vmax.f32 %v2556, %v2557
      %v2559 = vrot.slane %v2558, 1
      %v2560 = vmax.f32 %v2558, %v2559
      %v2561 = vsel %vm2301, %v2274, -inf
      %v2562 = vrot.slane %v2561, 4
      %v2563 = vmax.f32 %v2561, %v2562
      %v2564 = vrot.slane %v2563, 2
      %v2565 = vmax.f32 %v2563, %v2564
      %v2566 = vrot.slane %v2565, 1
      %v2567 = vmax.f32 %v2565, %v2566
      %v2568 = vsel %vm2301, %v2275, -inf
      %v2569 = vrot.slane %v2568, 4
      %v2570 = vmax.f32 %v2568, %v2569
      %v2571 = vrot.slane %v2570, 2
      %v2572 = vmax.f32 %v2570, %v2571
      %v2573 = vrot.slane %v2572, 1
      %v2574 = vmax.f32 %v2572, %v2573
      %v2575 = vsel %vm2301, %v2276, -inf
      %v2576 = vrot.slane %v2575, 4
      %v2577 = vmax.f32 %v2575, %v2576
      %v2578 = vrot.slane %v2577, 2
      %v2579 = vmax.f32 %v2577, %v2578
      %v2580 = vrot.slane %v2579, 1
      %v2581 = vmax.f32 %v2579, %v2580
      %v2582 = vsel %vm2301, %v2277, -inf
      %v2583 = vrot.slane %v2582, 4
      %v2584 = vmax.f32 %v2582, %v2583
      %v2585 = vrot.slane %v2584, 2
      %v2586 = vmax.f32 %v2584, %v2585
      %v2587 = vrot.slane %v2586, 1
      %v2588 = vmax.f32 %v2586, %v2587
      %v2589 = vsel %vm2301, %v2278, -inf
      %v2590 = vrot.slane %v2589, 4
      %v2591 = vmax.f32 %v2589, %v2590
      %v2592 = vrot.slane %v2591, 2
      %v2593 = vmax.f32 %v2591, %v2592
      %v2594 = vrot.slane %v2593, 1
      %v2595 = vmax.f32 %v2593, %v2594
      %v2596 = vsel %vm2301, %v2279, -inf
      %v2597 = vrot.slane %v2596, 4
      %v2598 = vmax.f32 %v2596, %v2597
      %v2599 = vrot.slane %v2598, 2
      %v2600 = vmax.f32 %v2598, %v2599
      %v2601 = vrot.slane %v2600, 1
      %v2602 = vmax.f32 %v2600, %v2601
      %v2603 = vsel %vm2301, %v2280, -inf
      %v2604 = vrot.slane %v2603, 4
      %v2605 = vmax.f32 %v2603, %v2604
      %v2606 = vrot.slane %v2605, 2
      %v2607 = vmax.f32 %v2605, %v2606
      %v2608 = vrot.slane %v2607, 1
      %v2609 = vmax.f32 %v2607, %v2608
      %v2610 = vsel %vm2301, %v2281, -inf
      %v2611 = vrot.slane %v2610, 4
      %v2612 = vmax.f32 %v2610, %v2611
      %v2613 = vrot.slane %v2612, 2
      %v2614 = vmax.f32 %v2612, %v2613
      %v2615 = vrot.slane %v2614, 1
      %v2616 = vmax.f32 %v2614, %v2615
      %v2617 = vsel %vm2301, %v2282, -inf
      %v2618 = vrot.slane %v2617, 4
      %v2619 = vmax.f32 %v2617, %v2618
      %v2620 = vrot.slane %v2619, 2
      %v2621 = vmax.f32 %v2619, %v2620
      %v2622 = vrot.slane %v2621, 1
      %v2623 = vmax.f32 %v2621, %v2622
      %v2624 = vsel %vm2301, %v2283, -inf
      %v2625 = vrot.slane %v2624, 4
      %v2626 = vmax.f32 %v2624, %v2625
      %v2627 = vrot.slane %v2626, 2
      %v2628 = vmax.f32 %v2626, %v2627
      %v2629 = vrot.slane %v2628, 1
      %v2630 = vmax.f32 %v2628, %v2629
      %v2631 = vsel %vm2301, %v2284, -inf
      %v2632 = vrot.slane %v2631, 4
      %v2633 = vmax.f32 %v2631, %v2632
      %v2634 = vrot.slane %v2633, 2
      %v2635 = vmax.f32 %v2633, %v2634
      %v2636 = vrot.slane %v2635, 1
      %v2637 = vmax.f32 %v2635, %v2636
      %v2638 = vsel %vm2301, %v2285, -inf
      %v2639 = vrot.slane %v2638, 4
      %v2640 = vmax.f32 %v2638, %v2639
      %v2641 = vrot.slane %v2640, 2
      %v2642 = vmax.f32 %v2640, %v2641
      %v2643 = vrot.slane %v2642, 1
      %v2644 = vmax.f32 %v2642, %v2643
      %v2645 = vsel %vm2301, %v2286, -inf
      %v2646 = vrot.slane %v2645, 4
      %v2647 = vmax.f32 %v2645, %v2646
      %v2648 = vrot.slane %v2647, 2
      %v2649 = vmax.f32 %v2647, %v2648
      %v2650 = vrot.slane %v2649, 1
      %v2651 = vmax.f32 %v2649, %v2650
      %v2652 = vsel %vm2301, %v2287, -inf
      %v2653 = vrot.slane %v2652, 4
      %v2654 = vmax.f32 %v2652, %v2653
      %v2655 = vrot.slane %v2654, 2
      %v2656 = vmax.f32 %v2654, %v2655
      %v2657 = vrot.slane %v2656, 1
      %v2658 = vmax.f32 %v2656, %v2657
      %v2659 = vsel %vm2301, %v2288, -inf
      %v2660 = vrot.slane %v2659, 4
      %v2661 = vmax.f32 %v2659, %v2660
      %v2662 = vrot.slane %v2661, 2
      %v2663 = vmax.f32 %v2661, %v2662
      %v2664 = vrot.slane %v2663, 1
      %v2665 = vmax.f32 %v2663, %v2664
      %v2666 = vsel %vm2301, %v2289, -inf
      %v2667 = vrot.slane %v2666, 4
      %v2668 = vmax.f32 %v2666, %v2667
      %v2669 = vrot.slane %v2668, 2
      %v2670 = vmax.f32 %v2668, %v2669
      %v2671 = vrot.slane %v2670, 1
      %v2672 = vmax.f32 %v2670, %v2671
      %v2673 = vsel %vm2301, %v2290, -inf
      %v2674 = vrot.slane %v2673, 4
      %v2675 = vmax.f32 %v2673, %v2674
      %v2676 = vrot.slane %v2675, 2
      %v2677 = vmax.f32 %v2675, %v2676
      %v2678 = vrot.slane %v2677, 1
      %v2679 = vmax.f32 %v2677, %v2678
      %v2680 = vsel %vm2301, %v2291, -inf
      %v2681 = vrot.slane %v2680, 4
      %v2682 = vmax.f32 %v2680, %v2681
      %v2683 = vrot.slane %v2682, 2
      %v2684 = vmax.f32 %v2682, %v2683
      %v2685 = vrot.slane %v2684, 1
      %v2686 = vmax.f32 %v2684, %v2685
      %v2687 = vsel %vm2301, %v2292, -inf
      %v2688 = vrot.slane %v2687, 4
      %v2689 = vmax.f32 %v2687, %v2688
      %v2690 = vrot.slane %v2689, 2
      %v2691 = vmax.f32 %v2689, %v2690
      %v2692 = vrot.slane %v2691, 1
      %v2693 = vmax.f32 %v2691, %v2692
      %v2694 = vsel %vm2301, %v2293, -inf
      %v2695 = vrot.slane %v2694, 4
      %v2696 = vmax.f32 %v2694, %v2695
      %v2697 = vrot.slane %v2696, 2
      %v2698 = vmax.f32 %v2696, %v2697
      %v2699 = vrot.slane %v2698, 1
      %v2700 = vmax.f32 %v2698, %v2699
      %v2701 = vsel %vm2301, %v2294, -inf
      %v2702 = vrot.slane %v2701, 4
      %v2703 = vmax.f32 %v2701, %v2702
      %v2704 = vrot.slane %v2703, 2
      %v2705 = vmax.f32 %v2703, %v2704
      %v2706 = vrot.slane %v2705, 1
      %v2707 = vmax.f32 %v2705, %v2706
      %v2708 = vsel %vm2301, %v2295, -inf
      %v2709 = vrot.slane %v2708, 4
      %v2710 = vmax.f32 %v2708, %v2709
      %v2711 = vrot.slane %v2710, 2
      %v2712 = vmax.f32 %v2710, %v2711
      %v2713 = vrot.slane %v2712, 1
      %v2714 = vmax.f32 %v2712, %v2713
      %v2715 = vsel %vm2301, %v2296, -inf
      %v2716 = vrot.slane %v2715, 4
      %v2717 = vmax.f32 %v2715, %v2716
      %v2718 = vrot.slane %v2717, 2
      %v2719 = vmax.f32 %v2717, %v2718
      %v2720 = vrot.slane %v2719, 1
      %v2721 = vmax.f32 %v2719, %v2720
      %v2722 = vsel %vm2301, %v2297, -inf
      %v2723 = vrot.slane %v2722, 4
      %v2724 = vmax.f32 %v2722, %v2723
      %v2725 = vrot.slane %v2724, 2
      %v2726 = vmax.f32 %v2724, %v2725
      %v2727 = vrot.slane %v2726, 1
      %v2728 = vmax.f32 %v2726, %v2727
      %v2729 = vsel %vm2301, %v2298, -inf
      %v2730 = vrot.slane %v2729, 4
      %v2731 = vmax.f32 %v2729, %v2730
      %v2732 = vrot.slane %v2731, 2
      %v2733 = vmax.f32 %v2731, %v2732
      %v2734 = vrot.slane %v2733, 1
      %v2735 = vmax.f32 %v2733, %v2734
      %v2736 = vsel %vm2301, %v2299, -inf
      %v2737 = vrot.slane %v2736, 4
      %v2738 = vmax.f32 %v2736, %v2737
      %v2739 = vrot.slane %v2738, 2
      %v2740 = vmax.f32 %v2738, %v2739
      %v2741 = vrot.slane %v2740, 1
      %v2742 = vmax.f32 %v2740, %v2741
      %v2743 = vsel %vm2301, %v2300, -inf
      %v2744 = vrot.slane %v2743, 4
      %v2745 = vmax.f32 %v2743, %v2744
      %v2746 = vrot.slane %v2745, 2
      %v2747 = vmax.f32 %v2745, %v2746
      %v2748 = vrot.slane %v2747, 1
      %v2749 = vmax.f32 %v2747, %v2748
      %vm2814 = vcmask 1041409
      %v2815 = vsel %vm2814, %v2315, %v2308
      %vm2816 = vcmask 1042434
      %v2817 = vsel %vm2816, %v2322, %v2815
      %vm2818 = vcmask 1043459
      %v2819 = vsel %vm2818, %v2329, %v2817
      %vm2820 = vcmask 1044484
      %v2821 = vsel %vm2820, %v2336, %v2819
      %vm2822 = vcmask 1045509
      %v2823 = vsel %vm2822, %v2343, %v2821
      %vm2824 = vcmask 1046534
      %v2825 = vsel %vm2824, %v2350, %v2823
      %vm2826 = vcmask 1047559
      %v2827 = vsel %vm2826, %v2357, %v2825
      %v2828 = vsel %vm2814, %v2371, %v2364
      %v2829 = vsel %vm2816, %v2378, %v2828
      %v2830 = vsel %vm2818, %v2385, %v2829
      %v2831 = vsel %vm2820, %v2392, %v2830
      %v2832 = vsel %vm2822, %v2399, %v2831
      %v2833 = vsel %vm2824, %v2406, %v2832
      %v2834 = vsel %vm2826, %v2413, %v2833
      %v2835 = vsel %vm2814, %v2427, %v2420
      %v2836 = vsel %vm2816, %v2434, %v2835
      %v2837 = vsel %vm2818, %v2441, %v2836
      %v2838 = vsel %vm2820, %v2448, %v2837
      %v2839 = vsel %vm2822, %v2455, %v2838
      %v2840 = vsel %vm2824, %v2462, %v2839
      %v2841 = vsel %vm2826, %v2469, %v2840
      %v2842 = vsel %vm2814, %v2483, %v2476
      %v2843 = vsel %vm2816, %v2490, %v2842
      %v2844 = vsel %vm2818, %v2497, %v2843
      %v2845 = vsel %vm2820, %v2504, %v2844
      %v2846 = vsel %vm2822, %v2511, %v2845
      %v2847 = vsel %vm2824, %v2518, %v2846
      %v2848 = vsel %vm2826, %v2525, %v2847
      %v2849 = vsel %vm2814, %v2539, %v2532
      %v2850 = vsel %vm2816, %v2546, %v2849
      %v2851 = vsel %vm2818, %v2553, %v2850
      %v2852 = vsel %vm2820, %v2560, %v2851
      %v2853 = vsel %vm2822, %v2567, %v2852
      %v2854 = vsel %vm2824, %v2574, %v2853
      %v2855 = vsel %vm2826, %v2581, %v2854
      %v2856 = vsel %vm2814, %v2595, %v2588
      %v2857 = vsel %vm2816, %v2602, %v2856
      %v2858 = vsel %vm2818, %v2609, %v2857
      %v2859 = vsel %vm2820, %v2616, %v2858
      %v2860 = vsel %vm2822, %v2623, %v2859
      %v2861 = vsel %vm2824, %v2630, %v2860
      %v2862 = vsel %vm2826, %v2637, %v2861
      %v2863 = vsel %vm2814, %v2651, %v2644
      %v2864 = vsel %vm2816, %v2658, %v2863
      %v2865 = vsel %vm2818, %v2665, %v2864
      %v2866 = vsel %vm2820, %v2672, %v2865
      %v2867 = vsel %vm2822, %v2679, %v2866
      %v2868 = vsel %vm2824, %v2686, %v2867
      %v2869 = vsel %vm2826, %v2693, %v2868
      %v2870 = vsel %vm2814, %v2707, %v2700
      %v2871 = vsel %vm2816, %v2714, %v2870
      %v2872 = vsel %vm2818, %v2721, %v2871
      %v2873 = vsel %vm2820, %v2728, %v2872
      %v2874 = vsel %vm2822, %v2735, %v2873
      %v2875 = vsel %vm2824, %v2742, %v2874
      %v2876 = vsel %vm2826, %v2749, %v2875
      %vm2885 = vcmask 130048
      %2886 = vst.msk [vmem:[%s221] sm:$0xff] %vm2885, %v2827
      %2887 = vst.msk [vmem:[%s221 + $0x8] sm:$0xff] %vm2885, %v2834
      %2888 = vst.msk [vmem:[%s221 + $0x10] sm:$0xff] %vm2885, %v2841
      %2889 = vst.msk [vmem:[%s221 + $0x18] sm:$0xff] %vm2885, %v2848
      %2890 = vst.msk [vmem:[%s221 + $0x20] sm:$0xff] %vm2885, %v2855
      %2891 = vst.msk [vmem:[%s221 + $0x28] sm:$0xff] %vm2885, %v2862
      %2892 = vst.msk [vmem:[%s221 + $0x30] sm:$0xff] %vm2885, %v2869
      %2893 = vst.msk [vmem:[%s221 + $0x38] sm:$0xff] %vm2885, %v2876
      %p2894 = scmp.lt.s32.totalorder %s18, 1
      %s2895 = scalar_select %p2894, %s18, 1
      %p2896 = scmp.lt.s32.totalorder %s19, 0
      %s2897 = scalar_select %p2896, %s19, 0
      %s2898 = smul.addr %s2895, 8
      %s2899 = sadd.s32 %s2897, %s2898
      %s2900 = smul.addr %s2899, 8
      %s2901 = scalar_lea.vmem %s3, %s2900
      // Predicated region
      $region33: #{tpu_custom_call.1} parent=31 // pred_check
        %p2902 = pneg %p124
      $region34: #{tpu_custom_call.1} parent=31 // pred_check_branch
        %2904 = sbr.rel (%p2902) target = $region36
      $region35: #{tpu_custom_call.1} parent=31 // pred_region
        _
      $region36: #{tpu_custom_call.1} parent=31 // pred_fallthru
        _
    $region32: #{tpu_custom_call.1} parent=5 // pred_fallthru
      _
    %p2905 = scmp.le.s32.totalorder 2, %s9
    // Predicated region
    $region37: #{tpu_custom_call.1} parent=5 // pred_check
      %p2906 = pneg %p2905
    $region38: #{tpu_custom_call.1} parent=5 // pred_check_branch
      %2908 = sbr.rel (%p2906) target = $region40
    $region39: #{tpu_custom_call.1} parent=5 // pred_region
      %s2909 = ssub.s32 %s9, 2
      // Predicated region
      $region41: #{tpu_custom_call.1} parent=39 // pred_check
        %p2910 = pneg %p130
      $region42: #{tpu_custom_call.1} parent=39 // pred_check_branch
        %2912 = sbr.rel (%p2910) target = $region44
      $region43: #{tpu_custom_call.1} parent=39 // pred_region
        %p2913 = scmp.lt.s32.totalorder %s20, 1
        %s2914 = scalar_select %p2913, %s20, 1
        %p2915 = scmp.lt.s32.totalorder %s21, 0
        %s2916 = scalar_select %p2915, %s21, 0
        %s2917 = smul.addr %s2914, 8
        %s2918 = sadd.s32 %s2916, %s2917
        %s2919 = smul.addr %s2918, 8
        %s2920 = scalar_lea.vmem %s3, %s2919
      $region44: #{tpu_custom_call.1} parent=39 // pred_fallthru
        _
    $region40: #{tpu_custom_call.1} parent=5 // pred_fallthru
      _
  $region6: #{tpu_custom_call.1} parent=0 // loop_footer
    %s13 = sadd.s32 1, %s9
  $region7: #{tpu_custom_call.1} parent=0 // loop_footer_branch
    %8 = sbr.rel target = $region3
  $region8: #{tpu_custom_call.1} parent=0 // loop_exit
    _

</llo_original>
